<compile_context>
chip_gen: v7x
topology: tpu7x:2x2x1
jax: 0.10.0
libtpu: 0.0.40
codegen_flags: <defaults>
</compile_context>

<pallas_src>
import jax
import jax.numpy as jnp
import numpy as np
from jax import lax
from jax.experimental import pallas as pl
from jax.experimental.pallas import tpu as pltpu

# ----------------------------- small config ---------------------------------
HIDDEN = 64
NUM_HEADS = 4
Q_LORA_RANK = 32
KV_LORA_RANK = 32
QK_NOPE = 16
QK_ROPE = 16
Q_HEAD_DIM = QK_NOPE + QK_ROPE          # 32
V_HEAD_DIM = 16
ROPE_THETA = 10000.0
RMS_EPS = 1e-6
SOFTMAX_SCALE = Q_HEAD_DIM ** (-0.5)

BSZ = 2
SEQ = 8

A_OUT = Q_LORA_RANK + KV_LORA_RANK + QK_ROPE   # 80  (q_a | c_kv | k_pe)
QD = NUM_HEADS * Q_HEAD_DIM                    # 128 (Q slab lanes == K slab lanes)
VD = NUM_HEADS * V_HEAD_DIM                    # 64  (V slab lanes)


# ------------------------------ fused kernel --------------------------------
def _mla_fused_kernel(x_ref, wa_ref, g_ref, wqkv_ref, trig_ref, wo_ref,
                      o_ref, attn_ref):
    """Whole layer for all batch elements / heads in one invocation."""
    x = x_ref[...]                                                 # [R, H]

    # --- merged A-projection: [R, q_lora | kv_lora | rope] --------------------
    a = jnp.dot(x, wa_ref[...], preferred_element_type=jnp.float32)   # [R, 80]

    # --- fused dual RMSNorm on the A slab (gain = 1 on the k_pe lanes) --------
    ssq = a * a
    var_q = jnp.mean(ssq[:, :Q_LORA_RANK], axis=-1, keepdims=True)
    var_kv = jnp.mean(ssq[:, Q_LORA_RANK:Q_LORA_RANK + KV_LORA_RANK],
                      axis=-1, keepdims=True)
    lane_a = lax.broadcasted_iota(jnp.int32, a.shape, 1)
    inv = jnp.where(lane_a < Q_LORA_RANK,
                    lax.rsqrt(var_q + RMS_EPS),
                    jnp.where(lane_a < Q_LORA_RANK + KV_LORA_RANK,
                              lax.rsqrt(var_kv + RMS_EPS), 1.0))
    a_n = a * inv * g_ref[...]                                     # [R, 80]

    # --- one merged B-projection: [R, Q(128) | K(128) | V(64)] ---------------
    # Softmax scale is pre-folded into the Q columns; the shared k_pe is spread
    # into each head's K block by an identity sub-matrix inside wqkv.
    qkv = jnp.dot(a_n, wqkv_ref[...], preferred_element_type=jnp.float32)
    q_slab = qkv[:, :QD]                                           # [R, 128]
    k_slab = qkv[:, QD:2 * QD]                                     # [R, 128]
    v_slab = qkv[:, 2 * QD:]                                       # [R, 64]

    # --- RoPE, vectorized across all heads on the full 128-lane slabs --------
    trig = trig_ref[...]
    cos_t = trig[:, :QD]          # 1 on nope lanes, cos(theta_d) on pe lanes
    sin_t = trig[:, QD:]          # 0 on nope lanes, -/+sin(theta_d) on pe lanes
    lane = lax.broadcasted_iota(jnp.int32, (x.shape[0], QD), 1)
    is_pe = (lane % Q_HEAD_DIM) >= QK_NOPE

    half = QK_ROPE // 2           # 8

    def rope_slab(t):
        # rotate_half per head: shift the pe lanes by +-8 within their own
        # 16-lane block.  Rolling the pe-masked slab by +8 AND -8 and summing
        # is exact (the "wrong-direction" partner always lands on a zeroed
        # nope lane) and is independent of pltpu.roll's direction convention.
        t_pe = jnp.where(is_pe, t, 0.0)
        rot = (pltpu.roll(t_pe, half, axis=1)
               + pltpu.roll(t_pe, QD - half, axis=1))
        return t * cos_t + rot * sin_t

    q_rot = rope_slab(q_slab)
    k_rot = rope_slab(k_slab)

    # --- attention: per batch element, per head (statically unrolled) --------
    dn = (((1,), (1,)), ((), ()))                # contract last dims (no k.T)
    for b in range(BSZ):
        r0, r1 = b * SEQ, (b + 1) * SEQ
        qb = q_rot[r0:r1]                        # [S, 128]
        kb = k_rot[r0:r1]                        # [S, 128]
        vb = v_slab[r0:r1]                       # [S, 64]
        for h in range(NUM_HEADS):
            c0 = h * Q_HEAD_DIM
            s = lax.dot_general(qb[:, c0:c0 + Q_HEAD_DIM],
                                kb[:, c0:c0 + Q_HEAD_DIM],
                                dn, preferred_element_type=jnp.float32)  # [S,S]
            s = s - jnp.max(s, axis=-1, keepdims=True)
            p = jnp.exp(s)
            p = p * pl.reciprocal(jnp.sum(p, axis=-1, keepdims=True),
                                  approx=True)
            attn_ref[r0:r1, h * V_HEAD_DIM:(h + 1) * V_HEAD_DIM] = jnp.dot(
                p, vb[:, h * V_HEAD_DIM:(h + 1) * V_HEAD_DIM],
                preferred_element_type=jnp.float32)

    # --- o_proj on the lane-dense attention slab ------------------------------
    o_ref[...] = jnp.dot(attn_ref[...], wo_ref[...],
                         preferred_element_type=jnp.float32)       # [R, H]


# ---------------------------- parameter setup --------------------------------
def init_params(key):
    ks = jax.random.split(key, 5)

    def w(k, shape):
        return jax.random.normal(k, shape, dtype=jnp.float32) * 0.05

    # Weights stored as [in_features, out_features] (torch Linear is [out, in]).
    return {
        "q_a_proj": w(ks[0], (HIDDEN, Q_LORA_RANK)),
        "q_a_ln": jnp.ones((Q_LORA_RANK,), jnp.float32),
        "q_b_proj": w(ks[1], (Q_LORA_RANK, NUM_HEADS * Q_HEAD_DIM)),
        "kv_a_proj": w(ks[2], (HIDDEN, KV_LORA_RANK + QK_ROPE)),
        "kv_a_ln": jnp.ones((KV_LORA_RANK,), jnp.float32),
        "kv_b_proj": w(ks[3], (KV_LORA_RANK, NUM_HEADS * (QK_NOPE + V_HEAD_DIM))),
        "o_proj": w(ks[4], (NUM_HEADS * V_HEAD_DIM, HIDDEN)),
    }


def rope_tables(seq_len):
    """Full-dim cos/sin tables (for the pure-JAX reference)."""
    inv_freq = 1.0 / (ROPE_THETA ** (jnp.arange(0, QK_ROPE, 2, dtype=jnp.float32)
                                     / QK_ROPE))
    t = jnp.arange(seq_len, dtype=jnp.float32)
    freqs = jnp.outer(t, inv_freq)
    emb = jnp.concatenate([freqs, freqs], axis=-1)            # [S, QK_ROPE]
    return jnp.cos(emb), jnp.sin(emb)


def prepare_params(params, bsz, seq):
    """One-time preprocessing: merged/permuted weights + signed trig tables."""
    # merged A weights and merged LN gains (gain 1 on the k_pe lanes)
    w_a = jnp.concatenate([params["q_a_proj"], params["kv_a_proj"]], axis=1)
    gains = jnp.concatenate(
        [params["q_a_ln"], params["kv_a_ln"],
         jnp.ones((QK_ROPE,), jnp.float32)]).reshape(1, A_OUT)

    # merged QKV B-weight: rows = [q_c(32) | ckv_n(32) | k_pe(16)],
    # columns = [Q slab(128) | K slab(128) | V slab(64)].
    qb = np.asarray(params["q_b_proj"], np.float32)            # [32, 128]
    kvb = np.asarray(params["kv_b_proj"], np.float32)          # [32, 128]
    w_qkv = np.zeros((A_OUT, 2 * QD + VD), np.float32)
    w_qkv[:Q_LORA_RANK, :QD] = qb * SOFTMAX_SCALE              # scale folded in
    r_kv = Q_LORA_RANK
    r_pe = Q_LORA_RANK + KV_LORA_RANK
    eye = np.eye(QK_ROPE, dtype=np.float32)
    for h in range(NUM_HEADS):
        kb = h * (QK_NOPE + V_HEAD_DIM)
        kcol = QD + h * Q_HEAD_DIM
        # K slab, head h: [k_nope_h | k_pe (identity spread, roped in-kernel)]
        w_qkv[r_kv:r_kv + KV_LORA_RANK, kcol:kcol + QK_NOPE] = kvb[:, kb:kb + QK_NOPE]
        w_qkv[r_pe:r_pe + QK_ROPE, kcol + QK_NOPE:kcol + Q_HEAD_DIM] = eye
        # V slab, head h
        vcol = 2 * QD + h * V_HEAD_DIM
        w_qkv[r_kv:r_kv + KV_LORA_RANK, vcol:vcol + V_HEAD_DIM] = \
            kvb[:, kb + QK_NOPE:kb + QK_NOPE + V_HEAD_DIM]

    # signed trig tables covering the full 128-lane Q/K slab layout:
    # per 32-lane head block -> [nope: cos=1,sin=0 | pe: cos, +-sin].
    inv_freq = 1.0 / (ROPE_THETA ** (jnp.arange(0, QK_ROPE, 2, dtype=jnp.float32)
                                     / QK_ROPE))
    pos = jnp.arange(seq, dtype=jnp.float32)
    freqs = jnp.outer(pos, inv_freq)                           # [S, 8]
    cos_f, sin_f = jnp.cos(freqs), jnp.sin(freqs)
    ones_np = jnp.ones((seq, QK_NOPE), jnp.float32)
    zeros_np = jnp.zeros((seq, QK_NOPE), jnp.float32)
    cos_head = jnp.concatenate([ones_np, cos_f, cos_f], axis=1)       # [S, 32]
    sin_head = jnp.concatenate([zeros_np, -sin_f, sin_f], axis=1)     # [S, 32]
    trig = jnp.concatenate([jnp.tile(cos_head, (1, NUM_HEADS)),
                            jnp.tile(sin_head, (1, NUM_HEADS))], axis=1)
    trig = jnp.tile(trig, (bsz, 1))                            # [B*S, 256]

    return {
        "w_a": w_a,
        "gains": gains,
        "w_qkv": jnp.asarray(w_qkv),
        "trig": trig,
        "w_o": params["o_proj"],
    }


# ------------------------------ forward pass ---------------------------------
def deepseek_v2_attention(prep, hidden_states):
    B, S, H = hidden_states.shape
    assert (B, S, H) == (BSZ, SEQ, HIDDEN)
    R = B * S
    x2d = hidden_states.reshape(R, H)
    full2d = lambda arr: pl.BlockSpec(arr.shape, lambda i: (0, 0))

    out2d = pl.pallas_call(
        _mla_fused_kernel,
        out_shape=jax.ShapeDtypeStruct((R, H), jnp.float32),
        grid=(1,),
        in_specs=[
            full2d(x2d),               # hidden states, stacked [B*S, H]
            full2d(prep["w_a"]),        # merged A-projection weight
            full2d(prep["gains"]),      # merged RMSNorm gains
            full2d(prep["w_qkv"]),      # merged (scaled/permuted) QKV weight
            full2d(prep["trig"]),       # merged signed cos/sin tables
            full2d(prep["w_o"]),        # o_proj weight
        ],
        out_specs=pl.BlockSpec((R, H), lambda i: (0, 0)),
        scratch_shapes=[pltpu.VMEM((R, VD), jnp.float32)],      # attn slab
        compiler_params=pltpu.CompilerParams(
            dimension_semantics=("arbitrary",)),
    )(x2d, prep["w_a"], prep["gains"], prep["w_qkv"], prep["trig"], prep["w_o"])
    return out2d.reshape(B, S, H)


# ------------------------- pure-JAX reference check --------------------------
def reference(params, hidden_states):
    B, S, H = hidden_states.shape
    x2d = hidden_states.reshape(B * S, H)

    def rms(x, w):
        v = jnp.mean(x * x, axis=-1, keepdims=True)
        return w * (x * lax.rsqrt(v + RMS_EPS))

    q = rms(x2d @ params["q_a_proj"], params["q_a_ln"]) @ params["q_b_proj"]
    q = q.reshape(B, S, NUM_HEADS, Q_HEAD_DIM).transpose(0, 2, 1, 3)
    q_nope, q_pe = q[..., :QK_NOPE], q[..., QK_NOPE:]

    ckv = x2d @ params["kv_a_proj"]
    compressed_kv, k_pe = ckv[:, :KV_LORA_RANK], ckv[:, KV_LORA_RANK:]
    k_pe = k_pe.reshape(B, S, 1, QK_ROPE).transpose(0, 2, 1, 3)
    kv = rms(compressed_kv, params["kv_a_ln"]) @ params["kv_b_proj"]
    kv = kv.reshape(B, S, NUM_HEADS, QK_NOPE + V_HEAD_DIM).transpose(0, 2, 1, 3)
    k_nope, v = kv[..., :QK_NOPE], kv[..., QK_NOPE:]

    cos, sin = rope_tables(S)

    def rot_half(x):
        d = x.shape[-1]
        return jnp.concatenate([-x[..., d // 2:], x[..., :d // 2]], axis=-1)

    q_pe = q_pe * cos + rot_half(q_pe) * sin
    k_pe = k_pe * cos + rot_half(k_pe) * sin

    qs = jnp.concatenate([q_nope, q_pe], axis=-1)
    ks = jnp.concatenate(
        [k_nope, jnp.broadcast_to(k_pe, (B, NUM_HEADS, S, QK_ROPE))], axis=-1)

    w = jnp.einsum("bhqd,bhkd->bhqk", qs, ks) * SOFTMAX_SCALE
    w = jax.nn.softmax(w, axis=-1)
    o = jnp.einsum("bhqk,bhkd->bhqd", w, v)
    o = o.transpose(0, 2, 1, 3).reshape(B * S, NUM_HEADS * V_HEAD_DIM)
    return (o @ params["o_proj"]).reshape(B, S, H)


# --------------------------------- main ---------------------------------------
if __name__ == "__main__":
    key = jax.random.PRNGKey(0)
    k_in, k_w = jax.random.split(key)
    hidden_states = jax.random.normal(k_in, (BSZ, SEQ, HIDDEN), dtype=jnp.float32)
    params = init_params(k_w)

    prep = prepare_params(params, BSZ, SEQ)          # one-time weight/table prep
    fwd = jax.jit(deepseek_v2_attention)

    out = jax.block_until_ready(fwd(prep, hidden_states))
    ref = jax.block_until_ready(reference(params, hidden_states))

    assert out.shape == (BSZ, SEQ, HIDDEN)
    np.testing.assert_allclose(np.asarray(out), np.asarray(ref), rtol=1e-2, atol=1e-2)

    print("KERNEL_OK")
</pallas_src>

<mosaic_0001>
module attributes {stable_mosaic.version = 11 : i64} {
  func.func @_mla_fused_kernel(%arg0: i32, %arg1: memref<16x64xf32, #tpu.memory_space<vmem>>, %arg2: memref<64x80xf32, #tpu.memory_space<vmem>>, %arg3: memref<1x80xf32, #tpu.memory_space<vmem>>, %arg4: memref<80x320xf32, #tpu.memory_space<vmem>>, %arg5: memref<16x256xf32, #tpu.memory_space<vmem>>, %arg6: memref<64x64xf32, #tpu.memory_space<vmem>>, %arg7: memref<16x64xf32, #tpu.memory_space<vmem>>, %arg8: memref<16x64xf32, #tpu.memory_space<vmem>>) attributes {dimension_semantics = [#tpu.dimension_semantics<arbitrary>], iteration_bounds = array<i64: 1>, scalar_prefetch = 0 : i64, scratch_operands = 1 : i64, tpu.core_type = #tpu.core_type<tc>, window_params = [{pipeline_mode = #tpu.pipeline_mode<synchronous>, transform_indices = @transform_0, window_bounds = array<i64: 16, 64>}, {pipeline_mode = #tpu.pipeline_mode<synchronous>, transform_indices = @transform_1, window_bounds = array<i64: 64, 80>}, {pipeline_mode = #tpu.pipeline_mode<synchronous>, transform_indices = @transform_2, window_bounds = array<i64: 1, 80>}, {pipeline_mode = #tpu.pipeline_mode<synchronous>, transform_indices = @transform_3, window_bounds = array<i64: 80, 320>}, {pipeline_mode = #tpu.pipeline_mode<synchronous>, transform_indices = @transform_4, window_bounds = array<i64: 16, 256>}, {pipeline_mode = #tpu.pipeline_mode<synchronous>, transform_indices = @transform_5, window_bounds = array<i64: 64, 64>}, {pipeline_mode = #tpu.pipeline_mode<synchronous>, transform_indices = @transform_6, window_bounds = array<i64: 16, 64>}]} {
    %c0 = arith.constant 0 : index
    %c0_0 = arith.constant 0 : index
    %0 = vector.load %arg1[%c0, %c0_0] : memref<16x64xf32, #tpu.memory_space<vmem>>, vector<16x64xf32>
    %c0_1 = arith.constant 0 : index
    %c0_2 = arith.constant 0 : index
    %1 = vector.load %arg2[%c0_1, %c0_2] : memref<64x80xf32, #tpu.memory_space<vmem>>, vector<64x80xf32>
    %cst = arith.constant dense<0.000000e+00> : vector<16x80xf32>
    %2 = tpu.matmul %0, %1, %cst {dimension_numbers = #tpu.dot_dimension_numbers<[1], [0], [0], [1], [0, 0, 1, 1], [], []>} : vector<16x64xf32>, vector<64x80xf32>, vector<16x80xf32> -> vector<16x80xf32>
    %3 = arith.mulf %2, %2 : vector<16x80xf32>
    %4 = vector.extract_strided_slice %3 {offsets = [0, 0], sizes = [16, 32], strides = [1, 1]} : vector<16x80xf32> to vector<16x32xf32>
    %cst_3 = arith.constant dense<0.000000e+00> : vector<16xf32>
    %5 = vector.multi_reduction <add>, %4, %cst_3 [1] : vector<16x32xf32> to vector<16xf32>
    %6 = vector.shape_cast %5 : vector<16xf32> to vector<16x1xf32>
    %cst_4 = arith.constant 3.200000e+01 : f32
    %7 = vector.broadcast %cst_4 : f32 to vector<16x1xf32>
    %8 = arith.divf %6, %7 : vector<16x1xf32>
    %9 = vector.extract_strided_slice %3 {offsets = [0, 32], sizes = [16, 32], strides = [1, 1]} : vector<16x80xf32> to vector<16x32xf32>
    %cst_5 = arith.constant dense<0.000000e+00> : vector<16xf32>
    %10 = vector.multi_reduction <add>, %9, %cst_5 [1] : vector<16x32xf32> to vector<16xf32>
    %11 = vector.shape_cast %10 : vector<16xf32> to vector<16x1xf32>
    %cst_6 = arith.constant 3.200000e+01 : f32
    %12 = vector.broadcast %cst_6 : f32 to vector<16x1xf32>
    %13 = arith.divf %11, %12 : vector<16x1xf32>
    %14 = tpu.iota {dimensions = array<i32: 1>} : vector<16x80xi32>
    %c32_i32 = arith.constant 32 : i32
    %15 = vector.broadcast %c32_i32 : i32 to vector<16x80xi32>
    %16 = arith.cmpi slt, %14, %15 : vector<16x80xi32>
    %cst_7 = arith.constant 9.99999997E-7 : f32
    %17 = vector.broadcast %cst_7 : f32 to vector<16x1xf32>
    %18 = arith.addf %8, %17 : vector<16x1xf32>
    %19 = math.rsqrt %18 : vector<16x1xf32>
    %c64_i32 = arith.constant 64 : i32
    %20 = vector.broadcast %c64_i32 : i32 to vector<16x80xi32>
    %21 = arith.cmpi slt, %14, %20 : vector<16x80xi32>
    %cst_8 = arith.constant 9.99999997E-7 : f32
    %22 = vector.broadcast %cst_8 : f32 to vector<16x1xf32>
    %23 = arith.addf %13, %22 : vector<16x1xf32>
    %24 = math.rsqrt %23 : vector<16x1xf32>
    %cst_9 = arith.constant 1.000000e+00 : f32
    %25 = vector.shape_cast %24 : vector<16x1xf32> to vector<16x1xf32>
    %26 = vector.broadcast %25 : vector<16x1xf32> to vector<16x80xf32>
    %27 = vector.broadcast %cst_9 : f32 to vector<16x80xf32>
    %28 = arith.select %21, %26, %27 : vector<16x80xi1>, vector<16x80xf32>
    %29 = vector.shape_cast %19 : vector<16x1xf32> to vector<16x1xf32>
    %30 = vector.broadcast %29 : vector<16x1xf32> to vector<16x80xf32>
    %31 = arith.select %16, %30, %28 : vector<16x80xi1>, vector<16x80xf32>
    %32 = arith.mulf %2, %31 : vector<16x80xf32>
    %c0_10 = arith.constant 0 : index
    %c0_11 = arith.constant 0 : index
    %33 = vector.load %arg3[%c0_10, %c0_11] : memref<1x80xf32, #tpu.memory_space<vmem>>, vector<1x80xf32>
    %34 = vector.broadcast %33 : vector<1x80xf32> to vector<16x80xf32>
    %35 = arith.mulf %32, %34 : vector<16x80xf32>
    %c0_12 = arith.constant 0 : index
    %c0_13 = arith.constant 0 : index
    %36 = vector.load %arg4[%c0_12, %c0_13] : memref<80x320xf32, #tpu.memory_space<vmem>>, vector<80x320xf32>
    %cst_14 = arith.constant dense<0.000000e+00> : vector<16x320xf32>
    %37 = tpu.matmul %35, %36, %cst_14 {dimension_numbers = #tpu.dot_dimension_numbers<[1], [0], [0], [1], [0, 0, 1, 1], [], []>} : vector<16x80xf32>, vector<80x320xf32>, vector<16x320xf32> -> vector<16x320xf32>
    %38 = vector.extract_strided_slice %37 {offsets = [0, 0], sizes = [16, 128], strides = [1, 1]} : vector<16x320xf32> to vector<16x128xf32>
    %39 = vector.extract_strided_slice %37 {offsets = [0, 128], sizes = [16, 128], strides = [1, 1]} : vector<16x320xf32> to vector<16x128xf32>
    %40 = vector.extract_strided_slice %37 {offsets = [0, 256], sizes = [16, 64], strides = [1, 1]} : vector<16x320xf32> to vector<16x64xf32>
    %c0_15 = arith.constant 0 : index
    %c0_16 = arith.constant 0 : index
    %41 = vector.load %arg5[%c0_15, %c0_16] : memref<16x256xf32, #tpu.memory_space<vmem>>, vector<16x256xf32>
    %42 = vector.extract_strided_slice %41 {offsets = [0, 0], sizes = [16, 128], strides = [1, 1]} : vector<16x256xf32> to vector<16x128xf32>
    %43 = vector.extract_strided_slice %41 {offsets = [0, 128], sizes = [16, 128], strides = [1, 1]} : vector<16x256xf32> to vector<16x128xf32>
    %44 = tpu.iota {dimensions = array<i32: 1>} : vector<16x128xi32>
    %c32_i32_17 = arith.constant 32 : i32
    %c0_i32 = arith.constant 0 : i32
    %45 = arith.cmpi eq, %c32_i32_17, %c0_i32 : i32
    %c1_i32 = arith.constant 1 : i32
    %46 = arith.select %45, %c1_i32, %c32_i32_17 : i32
    %47 = vector.broadcast %46 : i32 to vector<16x128xi32>
    %48 = arith.remsi %44, %47 : vector<16x128xi32>
    %c0_i32_18 = arith.constant 0 : i32
    %49 = vector.broadcast %c0_i32_18 : i32 to vector<16x128xi32>
    %50 = arith.cmpi ne, %48, %49 : vector<16x128xi32>
    %c0_i32_19 = arith.constant 0 : i32
    %51 = vector.broadcast %c0_i32_19 : i32 to vector<16x128xi32>
    %52 = arith.cmpi slt, %48, %51 : vector<16x128xi32>
    %c0_i32_20 = arith.constant 0 : i32
    %53 = arith.cmpi slt, %46, %c0_i32_20 : i32
    %54 = vector.broadcast %53 : i1 to vector<16x128xi1>
    %55 = vector.broadcast %54 : vector<16x128xi1> to vector<16x128xi1>
    %56 = arith.xori %52, %55 : vector<16x128xi1>
    %57 = arith.andi %56, %50 : vector<16x128xi1>
    %58 = vector.broadcast %46 : i32 to vector<16x128xi32>
    %59 = arith.addi %48, %58 : vector<16x128xi32>
    %60 = arith.select %57, %59, %48 : vector<16x128xi1>, vector<16x128xi32>
    %c16_i32 = arith.constant 16 : i32
    %61 = vector.broadcast %c16_i32 : i32 to vector<16x128xi32>
    %62 = arith.cmpi sge, %60, %61 : vector<16x128xi32>
    %cst_21 = arith.constant 0.000000e+00 : f32
    %63 = vector.broadcast %cst_21 : f32 to vector<16x128xf32>
    %64 = arith.select %62, %38, %63 : vector<16x128xi1>, vector<16x128xf32>
    %c8_i32 = arith.constant 8 : i32
    %65 = tpu.dynamic_rotate %64 by %c8_i32 dim 1 : vector<16x128xf32>, i32 -> vector<16x128xf32>
    %c120_i32 = arith.constant 120 : i32
    %66 = tpu.dynamic_rotate %64 by %c120_i32 dim 1 : vector<16x128xf32>, i32 -> vector<16x128xf32>
    %67 = arith.addf %65, %66 : vector<16x128xf32>
    %68 = arith.mulf %38, %42 : vector<16x128xf32>
    %69 = arith.mulf %67, %43 : vector<16x128xf32>
    %70 = arith.addf %68, %69 : vector<16x128xf32>
    %cst_22 = arith.constant 0.000000e+00 : f32
    %71 = vector.broadcast %cst_22 : f32 to vector<16x128xf32>
    %72 = arith.select %62, %39, %71 : vector<16x128xi1>, vector<16x128xf32>
    %c8_i32_23 = arith.constant 8 : i32
    %73 = tpu.dynamic_rotate %72 by %c8_i32_23 dim 1 : vector<16x128xf32>, i32 -> vector<16x128xf32>
    %c120_i32_24 = arith.constant 120 : i32
    %74 = tpu.dynamic_rotate %72 by %c120_i32_24 dim 1 : vector<16x128xf32>, i32 -> vector<16x128xf32>
    %75 = arith.addf %73, %74 : vector<16x128xf32>
    %76 = arith.mulf %39, %42 : vector<16x128xf32>
    %77 = arith.mulf %75, %43 : vector<16x128xf32>
    %78 = arith.addf %76, %77 : vector<16x128xf32>
    %79 = vector.extract_strided_slice %70 {offsets = [0, 0], sizes = [8, 128], strides = [1, 1]} : vector<16x128xf32> to vector<8x128xf32>
    %80 = vector.extract_strided_slice %78 {offsets = [0, 0], sizes = [8, 128], strides = [1, 1]} : vector<16x128xf32> to vector<8x128xf32>
    %81 = vector.extract_strided_slice %40 {offsets = [0, 0], sizes = [8, 64], strides = [1, 1]} : vector<16x64xf32> to vector<8x64xf32>
    %82 = vector.extract_strided_slice %79 {offsets = [0, 0], sizes = [8, 32], strides = [1, 1]} : vector<8x128xf32> to vector<8x32xf32>
    %83 = vector.extract_strided_slice %80 {offsets = [0, 0], sizes = [8, 32], strides = [1, 1]} : vector<8x128xf32> to vector<8x32xf32>
    %cst_25 = arith.constant dense<0.000000e+00> : vector<8x8xf32>
    %84 = tpu.matmul %82, %83, %cst_25 {dimension_numbers = #tpu.dot_dimension_numbers<[1], [1], [0], [0], [0, 0, 1, 0], [], []>} : vector<8x32xf32>, vector<8x32xf32>, vector<8x8xf32> -> vector<8x8xf32>
    %cst_26 = arith.constant dense<0xFF800000> : vector<8xf32>
    %85 = vector.multi_reduction <maximumf>, %84, %cst_26 [1] : vector<8x8xf32> to vector<8xf32>
    %86 = vector.shape_cast %85 : vector<8xf32> to vector<8x1xf32>
    %87 = vector.broadcast %86 : vector<8x1xf32> to vector<8x8xf32>
    %88 = arith.subf %84, %87 : vector<8x8xf32>
    %89 = math.exp %88 : vector<8x8xf32>
    %cst_27 = arith.constant dense<0.000000e+00> : vector<8xf32>
    %90 = vector.multi_reduction <add>, %89, %cst_27 [1] : vector<8x8xf32> to vector<8xf32>
    %91 = vector.shape_cast %90 : vector<8xf32> to vector<8x1xf32>
    %92 = tpu.reciprocal %91 {approx = true} : vector<8x1xf32> -> vector<8x1xf32>
    %93 = vector.broadcast %92 : vector<8x1xf32> to vector<8x8xf32>
    %94 = arith.mulf %89, %93 : vector<8x8xf32>
    %95 = vector.extract_strided_slice %81 {offsets = [0, 0], sizes = [8, 16], strides = [1, 1]} : vector<8x64xf32> to vector<8x16xf32>
    %cst_28 = arith.constant dense<0.000000e+00> : vector<8x16xf32>
    %96 = tpu.matmul %94, %95, %cst_28 {dimension_numbers = #tpu.dot_dimension_numbers<[1], [0], [0], [1], [0, 0, 1, 1], [], []>} : vector<8x8xf32>, vector<8x16xf32>, vector<8x16xf32> -> vector<8x16xf32>
    %c0_29 = arith.constant 0 : index
    %c0_30 = arith.constant 0 : index
    %97 = vector.load %arg8[%c0_29, %c0_30] : memref<16x64xf32, #tpu.memory_space<vmem>>, vector<8x16xf32>
    tpu.vector_store %arg8[%c0_29, %c0_30], %96 {strides = array<i32>} : memref<16x64xf32, #tpu.memory_space<vmem>>, vector<8x16xf32>,
    %98 = vector.extract_strided_slice %79 {offsets = [0, 32], sizes = [8, 32], strides = [1, 1]} : vector<8x128xf32> to vector<8x32xf32>
    %99 = vector.extract_strided_slice %80 {offsets = [0, 32], sizes = [8, 32], strides = [1, 1]} : vector<8x128xf32> to vector<8x32xf32>
    %cst_31 = arith.constant dense<0.000000e+00> : vector<8x8xf32>
    %100 = tpu.matmul %98, %99, %cst_31 {dimension_numbers = #tpu.dot_dimension_numbers<[1], [1], [0], [0], [0, 0, 1, 0], [], []>} : vector<8x32xf32>, vector<8x32xf32>, vector<8x8xf32> -> vector<8x8xf32>
    %cst_32 = arith.constant dense<0xFF800000> : vector<8xf32>
    %101 = vector.multi_reduction <maximumf>, %100, %cst_32 [1] : vector<8x8xf32> to vector<8xf32>
    %102 = vector.shape_cast %101 : vector<8xf32> to vector<8x1xf32>
    %103 = vector.broadcast %102 : vector<8x1xf32> to vector<8x8xf32>
    %104 = arith.subf %100, %103 : vector<8x8xf32>
    %105 = math.exp %104 : vector<8x8xf32>
    %cst_33 = arith.constant dense<0.000000e+00> : vector<8xf32>
    %106 = vector.multi_reduction <add>, %105, %cst_33 [1] : vector<8x8xf32> to vector<8xf32>
    %107 = vector.shape_cast %106 : vector<8xf32> to vector<8x1xf32>
    %108 = tpu.reciprocal %107 {approx = true} : vector<8x1xf32> -> vector<8x1xf32>
    %109 = vector.broadcast %108 : vector<8x1xf32> to vector<8x8xf32>
    %110 = arith.mulf %105, %109 : vector<8x8xf32>
    %111 = vector.extract_strided_slice %81 {offsets = [0, 16], sizes = [8, 16], strides = [1, 1]} : vector<8x64xf32> to vector<8x16xf32>
    %cst_34 = arith.constant dense<0.000000e+00> : vector<8x16xf32>
    %112 = tpu.matmul %110, %111, %cst_34 {dimension_numbers = #tpu.dot_dimension_numbers<[1], [0], [0], [1], [0, 0, 1, 1], [], []>} : vector<8x8xf32>, vector<8x16xf32>, vector<8x16xf32> -> vector<8x16xf32>
    %c0_35 = arith.constant 0 : index
    %c16 = arith.constant 16 : index
    %113 = vector.load %arg8[%c0_35, %c16] : memref<16x64xf32, #tpu.memory_space<vmem>>, vector<8x16xf32>
    tpu.vector_store %arg8[%c0_35, %c16], %112 {strides = array<i32>} : memref<16x64xf32, #tpu.memory_space<vmem>>, vector<8x16xf32>,
    %114 = vector.extract_strided_slice %79 {offsets = [0, 64], sizes = [8, 32], strides = [1, 1]} : vector<8x128xf32> to vector<8x32xf32>
    %115 = vector.extract_strided_slice %80 {offsets = [0, 64], sizes = [8, 32], strides = [1, 1]} : vector<8x128xf32> to vector<8x32xf32>
    %cst_36 = arith.constant dense<0.000000e+00> : vector<8x8xf32>
    %116 = tpu.matmul %114, %115, %cst_36 {dimension_numbers = #tpu.dot_dimension_numbers<[1], [1], [0], [0], [0, 0, 1, 0], [], []>} : vector<8x32xf32>, vector<8x32xf32>, vector<8x8xf32> -> vector<8x8xf32>
    %cst_37 = arith.constant dense<0xFF800000> : vector<8xf32>
    %117 = vector.multi_reduction <maximumf>, %116, %cst_37 [1] : vector<8x8xf32> to vector<8xf32>
    %118 = vector.shape_cast %117 : vector<8xf32> to vector<8x1xf32>
    %119 = vector.broadcast %118 : vector<8x1xf32> to vector<8x8xf32>
    %120 = arith.subf %116, %119 : vector<8x8xf32>
    %121 = math.exp %120 : vector<8x8xf32>
    %cst_38 = arith.constant dense<0.000000e+00> : vector<8xf32>
    %122 = vector.multi_reduction <add>, %121, %cst_38 [1] : vector<8x8xf32> to vector<8xf32>
    %123 = vector.shape_cast %122 : vector<8xf32> to vector<8x1xf32>
    %124 = tpu.reciprocal %123 {approx = true} : vector<8x1xf32> -> vector<8x1xf32>
    %125 = vector.broadcast %124 : vector<8x1xf32> to vector<8x8xf32>
    %126 = arith.mulf %121, %125 : vector<8x8xf32>
    %127 = vector.extract_strided_slice %81 {offsets = [0, 32], sizes = [8, 16], strides = [1, 1]} : vector<8x64xf32> to vector<8x16xf32>
    %cst_39 = arith.constant dense<0.000000e+00> : vector<8x16xf32>
    %128 = tpu.matmul %126, %127, %cst_39 {dimension_numbers = #tpu.dot_dimension_numbers<[1], [0], [0], [1], [0, 0, 1, 1], [], []>} : vector<8x8xf32>, vector<8x16xf32>, vector<8x16xf32> -> vector<8x16xf32>
    %c0_40 = arith.constant 0 : index
    %c32 = arith.constant 32 : index
    %129 = vector.load %arg8[%c0_40, %c32] : memref<16x64xf32, #tpu.memory_space<vmem>>, vector<8x16xf32>
    tpu.vector_store %arg8[%c0_40, %c32], %128 {strides = array<i32>} : memref<16x64xf32, #tpu.memory_space<vmem>>, vector<8x16xf32>,
    %130 = vector.extract_strided_slice %79 {offsets = [0, 96], sizes = [8, 32], strides = [1, 1]} : vector<8x128xf32> to vector<8x32xf32>
    %131 = vector.extract_strided_slice %80 {offsets = [0, 96], sizes = [8, 32], strides = [1, 1]} : vector<8x128xf32> to vector<8x32xf32>
    %cst_41 = arith.constant dense<0.000000e+00> : vector<8x8xf32>
    %132 = tpu.matmul %130, %131, %cst_41 {dimension_numbers = #tpu.dot_dimension_numbers<[1], [1], [0], [0], [0, 0, 1, 0], [], []>} : vector<8x32xf32>, vector<8x32xf32>, vector<8x8xf32> -> vector<8x8xf32>
    %cst_42 = arith.constant dense<0xFF800000> : vector<8xf32>
    %133 = vector.multi_reduction <maximumf>, %132, %cst_42 [1] : vector<8x8xf32> to vector<8xf32>
    %134 = vector.shape_cast %133 : vector<8xf32> to vector<8x1xf32>
    %135 = vector.broadcast %134 : vector<8x1xf32> to vector<8x8xf32>
    %136 = arith.subf %132, %135 : vector<8x8xf32>
    %137 = math.exp %136 : vector<8x8xf32>
    %cst_43 = arith.constant dense<0.000000e+00> : vector<8xf32>
    %138 = vector.multi_reduction <add>, %137, %cst_43 [1] : vector<8x8xf32> to vector<8xf32>
    %139 = vector.shape_cast %138 : vector<8xf32> to vector<8x1xf32>
    %140 = tpu.reciprocal %139 {approx = true} : vector<8x1xf32> -> vector<8x1xf32>
    %141 = vector.broadcast %140 : vector<8x1xf32> to vector<8x8xf32>
    %142 = arith.mulf %137, %141 : vector<8x8xf32>
    %143 = vector.extract_strided_slice %81 {offsets = [0, 48], sizes = [8, 16], strides = [1, 1]} : vector<8x64xf32> to vector<8x16xf32>
    %cst_44 = arith.constant dense<0.000000e+00> : vector<8x16xf32>
    %144 = tpu.matmul %142, %143, %cst_44 {dimension_numbers = #tpu.dot_dimension_numbers<[1], [0], [0], [1], [0, 0, 1, 1], [], []>} : vector<8x8xf32>, vector<8x16xf32>, vector<8x16xf32> -> vector<8x16xf32>
    %c0_45 = arith.constant 0 : index
    %c48 = arith.constant 48 : index
    %145 = vector.load %arg8[%c0_45, %c48] : memref<16x64xf32, #tpu.memory_space<vmem>>, vector<8x16xf32>
    tpu.vector_store %arg8[%c0_45, %c48], %144 {strides = array<i32>} : memref<16x64xf32, #tpu.memory_space<vmem>>, vector<8x16xf32>,
    %146 = vector.extract_strided_slice %70 {offsets = [8, 0], sizes = [8, 128], strides = [1, 1]} : vector<16x128xf32> to vector<8x128xf32>
    %147 = vector.extract_strided_slice %78 {offsets = [8, 0], sizes = [8, 128], strides = [1, 1]} : vector<16x128xf32> to vector<8x128xf32>
    %148 = vector.extract_strided_slice %40 {offsets = [8, 0], sizes = [8, 64], strides = [1, 1]} : vector<16x64xf32> to vector<8x64xf32>
    %149 = vector.extract_strided_slice %146 {offsets = [0, 0], sizes = [8, 32], strides = [1, 1]} : vector<8x128xf32> to vector<8x32xf32>
    %150 = vector.extract_strided_slice %147 {offsets = [0, 0], sizes = [8, 32], strides = [1, 1]} : vector<8x128xf32> to vector<8x32xf32>
    %cst_46 = arith.constant dense<0.000000e+00> : vector<8x8xf32>
    %151 = tpu.matmul %149, %150, %cst_46 {dimension_numbers = #tpu.dot_dimension_numbers<[1], [1], [0], [0], [0, 0, 1, 0], [], []>} : vector<8x32xf32>, vector<8x32xf32>, vector<8x8xf32> -> vector<8x8xf32>
    %cst_47 = arith.constant dense<0xFF800000> : vector<8xf32>
    %152 = vector.multi_reduction <maximumf>, %151, %cst_47 [1] : vector<8x8xf32> to vector<8xf32>
    %153 = vector.shape_cast %152 : vector<8xf32> to vector<8x1xf32>
    %154 = vector.broadcast %153 : vector<8x1xf32> to vector<8x8xf32>
    %155 = arith.subf %151, %154 : vector<8x8xf32>
    %156 = math.exp %155 : vector<8x8xf32>
    %cst_48 = arith.constant dense<0.000000e+00> : vector<8xf32>
    %157 = vector.multi_reduction <add>, %156, %cst_48 [1] : vector<8x8xf32> to vector<8xf32>
    %158 = vector.shape_cast %157 : vector<8xf32> to vector<8x1xf32>
    %159 = tpu.reciprocal %158 {approx = true} : vector<8x1xf32> -> vector<8x1xf32>
    %160 = vector.broadcast %159 : vector<8x1xf32> to vector<8x8xf32>
    %161 = arith.mulf %156, %160 : vector<8x8xf32>
    %162 = vector.extract_strided_slice %148 {offsets = [0, 0], sizes = [8, 16], strides = [1, 1]} : vector<8x64xf32> to vector<8x16xf32>
    %cst_49 = arith.constant dense<0.000000e+00> : vector<8x16xf32>
    %163 = tpu.matmul %161, %162, %cst_49 {dimension_numbers = #tpu.dot_dimension_numbers<[1], [0], [0], [1], [0, 0, 1, 1], [], []>} : vector<8x8xf32>, vector<8x16xf32>, vector<8x16xf32> -> vector<8x16xf32>
    %c8 = arith.constant 8 : index
    %c0_50 = arith.constant 0 : index
    %164 = vector.load %arg8[%c8, %c0_50] : memref<16x64xf32, #tpu.memory_space<vmem>>, vector<8x16xf32>
    tpu.vector_store %arg8[%c8, %c0_50], %163 {strides = array<i32>} : memref<16x64xf32, #tpu.memory_space<vmem>>, vector<8x16xf32>,
    %165 = vector.extract_strided_slice %146 {offsets = [0, 32], sizes = [8, 32], strides = [1, 1]} : vector<8x128xf32> to vector<8x32xf32>
    %166 = vector.extract_strided_slice %147 {offsets = [0, 32], sizes = [8, 32], strides = [1, 1]} : vector<8x128xf32> to vector<8x32xf32>
    %cst_51 = arith.constant dense<0.000000e+00> : vector<8x8xf32>
    %167 = tpu.matmul %165, %166, %cst_51 {dimension_numbers = #tpu.dot_dimension_numbers<[1], [1], [0], [0], [0, 0, 1, 0], [], []>} : vector<8x32xf32>, vector<8x32xf32>, vector<8x8xf32> -> vector<8x8xf32>
    %cst_52 = arith.constant dense<0xFF800000> : vector<8xf32>
    %168 = vector.multi_reduction <maximumf>, %167, %cst_52 [1] : vector<8x8xf32> to vector<8xf32>
    %169 = vector.shape_cast %168 : vector<8xf32> to vector<8x1xf32>
    %170 = vector.broadcast %169 : vector<8x1xf32> to vector<8x8xf32>
    %171 = arith.subf %167, %170 : vector<8x8xf32>
    %172 = math.exp %171 : vector<8x8xf32>
    %cst_53 = arith.constant dense<0.000000e+00> : vector<8xf32>
    %173 = vector.multi_reduction <add>, %172, %cst_53 [1] : vector<8x8xf32> to vector<8xf32>
    %174 = vector.shape_cast %173 : vector<8xf32> to vector<8x1xf32>
    %175 = tpu.reciprocal %174 {approx = true} : vector<8x1xf32> -> vector<8x1xf32>
    %176 = vector.broadcast %175 : vector<8x1xf32> to vector<8x8xf32>
    %177 = arith.mulf %172, %176 : vector<8x8xf32>
    %178 = vector.extract_strided_slice %148 {offsets = [0, 16], sizes = [8, 16], strides = [1, 1]} : vector<8x64xf32> to vector<8x16xf32>
    %cst_54 = arith.constant dense<0.000000e+00> : vector<8x16xf32>
    %179 = tpu.matmul %177, %178, %cst_54 {dimension_numbers = #tpu.dot_dimension_numbers<[1], [0], [0], [1], [0, 0, 1, 1], [], []>} : vector<8x8xf32>, vector<8x16xf32>, vector<8x16xf32> -> vector<8x16xf32>
    %c8_55 = arith.constant 8 : index
    %c16_56 = arith.constant 16 : index
    %180 = vector.load %arg8[%c8_55, %c16_56] : memref<16x64xf32, #tpu.memory_space<vmem>>, vector<8x16xf32>
    tpu.vector_store %arg8[%c8_55, %c16_56], %179 {strides = array<i32>} : memref<16x64xf32, #tpu.memory_space<vmem>>, vector<8x16xf32>,
    %181 = vector.extract_strided_slice %146 {offsets = [0, 64], sizes = [8, 32], strides = [1, 1]} : vector<8x128xf32> to vector<8x32xf32>
    %182 = vector.extract_strided_slice %147 {offsets = [0, 64], sizes = [8, 32], strides = [1, 1]} : vector<8x128xf32> to vector<8x32xf32>
    %cst_57 = arith.constant dense<0.000000e+00> : vector<8x8xf32>
    %183 = tpu.matmul %181, %182, %cst_57 {dimension_numbers = #tpu.dot_dimension_numbers<[1], [1], [0], [0], [0, 0, 1, 0], [], []>} : vector<8x32xf32>, vector<8x32xf32>, vector<8x8xf32> -> vector<8x8xf32>
    %cst_58 = arith.constant dense<0xFF800000> : vector<8xf32>
    %184 = vector.multi_reduction <maximumf>, %183, %cst_58 [1] : vector<8x8xf32> to vector<8xf32>
    %185 = vector.shape_cast %184 : vector<8xf32> to vector<8x1xf32>
    %186 = vector.broadcast %185 : vector<8x1xf32> to vector<8x8xf32>
    %187 = arith.subf %183, %186 : vector<8x8xf32>
    %188 = math.exp %187 : vector<8x8xf32>
    %cst_59 = arith.constant dense<0.000000e+00> : vector<8xf32>
    %189 = vector.multi_reduction <add>, %188, %cst_59 [1] : vector<8x8xf32> to vector<8xf32>
    %190 = vector.shape_cast %189 : vector<8xf32> to vector<8x1xf32>
    %191 = tpu.reciprocal %190 {approx = true} : vector<8x1xf32> -> vector<8x1xf32>
    %192 = vector.broadcast %191 : vector<8x1xf32> to vector<8x8xf32>
    %193 = arith.mulf %188, %192 : vector<8x8xf32>
    %194 = vector.extract_strided_slice %148 {offsets = [0, 32], sizes = [8, 16], strides = [1, 1]} : vector<8x64xf32> to vector<8x16xf32>
    %cst_60 = arith.constant dense<0.000000e+00> : vector<8x16xf32>
    %195 = tpu.matmul %193, %194, %cst_60 {dimension_numbers = #tpu.dot_dimension_numbers<[1], [0], [0], [1], [0, 0, 1, 1], [], []>} : vector<8x8xf32>, vector<8x16xf32>, vector<8x16xf32> -> vector<8x16xf32>
    %c8_61 = arith.constant 8 : index
    %c32_62 = arith.constant 32 : index
    %196 = vector.load %arg8[%c8_61, %c32_62] : memref<16x64xf32, #tpu.memory_space<vmem>>, vector<8x16xf32>
    tpu.vector_store %arg8[%c8_61, %c32_62], %195 {strides = array<i32>} : memref<16x64xf32, #tpu.memory_space<vmem>>, vector<8x16xf32>,
    %197 = vector.extract_strided_slice %146 {offsets = [0, 96], sizes = [8, 32], strides = [1, 1]} : vector<8x128xf32> to vector<8x32xf32>
    %198 = vector.extract_strided_slice %147 {offsets = [0, 96], sizes = [8, 32], strides = [1, 1]} : vector<8x128xf32> to vector<8x32xf32>
    %cst_63 = arith.constant dense<0.000000e+00> : vector<8x8xf32>
    %199 = tpu.matmul %197, %198, %cst_63 {dimension_numbers = #tpu.dot_dimension_numbers<[1], [1], [0], [0], [0, 0, 1, 0], [], []>} : vector<8x32xf32>, vector<8x32xf32>, vector<8x8xf32> -> vector<8x8xf32>
    %cst_64 = arith.constant dense<0xFF800000> : vector<8xf32>
    %200 = vector.multi_reduction <maximumf>, %199, %cst_64 [1] : vector<8x8xf32> to vector<8xf32>
    %201 = vector.shape_cast %200 : vector<8xf32> to vector<8x1xf32>
    %202 = vector.broadcast %201 : vector<8x1xf32> to vector<8x8xf32>
    %203 = arith.subf %199, %202 : vector<8x8xf32>
    %204 = math.exp %203 : vector<8x8xf32>
    %cst_65 = arith.constant dense<0.000000e+00> : vector<8xf32>
    %205 = vector.multi_reduction <add>, %204, %cst_65 [1] : vector<8x8xf32> to vector<8xf32>
    %206 = vector.shape_cast %205 : vector<8xf32> to vector<8x1xf32>
    %207 = tpu.reciprocal %206 {approx = true} : vector<8x1xf32> -> vector<8x1xf32>
    %208 = vector.broadcast %207 : vector<8x1xf32> to vector<8x8xf32>
    %209 = arith.mulf %204, %208 : vector<8x8xf32>
    %210 = vector.extract_strided_slice %148 {offsets = [0, 48], sizes = [8, 16], strides = [1, 1]} : vector<8x64xf32> to vector<8x16xf32>
    %cst_66 = arith.constant dense<0.000000e+00> : vector<8x16xf32>
    %211 = tpu.matmul %209, %210, %cst_66 {dimension_numbers = #tpu.dot_dimension_numbers<[1], [0], [0], [1], [0, 0, 1, 1], [], []>} : vector<8x8xf32>, vector<8x16xf32>, vector<8x16xf32> -> vector<8x16xf32>
    %c8_67 = arith.constant 8 : index
    %c48_68 = arith.constant 48 : index
    %212 = vector.load %arg8[%c8_67, %c48_68] : memref<16x64xf32, #tpu.memory_space<vmem>>, vector<8x16xf32>
    tpu.vector_store %arg8[%c8_67, %c48_68], %211 {strides = array<i32>} : memref<16x64xf32, #tpu.memory_space<vmem>>, vector<8x16xf32>,
    %c0_69 = arith.constant 0 : index
    %c0_70 = arith.constant 0 : index
    %213 = vector.load %arg8[%c0_69, %c0_70] : memref<16x64xf32, #tpu.memory_space<vmem>>, vector<16x64xf32>
    %c0_71 = arith.constant 0 : index
    %c0_72 = arith.constant 0 : index
    %214 = vector.load %arg6[%c0_71, %c0_72] : memref<64x64xf32, #tpu.memory_space<vmem>>, vector<64x64xf32>
    %cst_73 = arith.constant dense<0.000000e+00> : vector<16x64xf32>
    %215 = tpu.matmul %213, %214, %cst_73 {dimension_numbers = #tpu.dot_dimension_numbers<[1], [0], [0], [1], [0, 0, 1, 1], [], []>} : vector<16x64xf32>, vector<64x64xf32>, vector<16x64xf32> -> vector<16x64xf32>
    %c0_74 = arith.constant 0 : index
    %c0_75 = arith.constant 0 : index
    %216 = vector.load %arg7[%c0_74, %c0_75] : memref<16x64xf32, #tpu.memory_space<vmem>>, vector<16x64xf32>
    tpu.vector_store %arg7[%c0_74, %c0_75], %215 {strides = array<i32>} : memref<16x64xf32, #tpu.memory_space<vmem>>, vector<16x64xf32>,
    return
  }
  func.func @transform_0(%arg0: i32) -> (i32, i32) {
    %c0_i32 = arith.constant 0 : i32
    %c0_i32_0 = arith.constant 0 : i32
    %c0_i32_1 = arith.constant 0 : i32
    return %c0_i32, %c0_i32_0 : i32, i32
  }
  func.func @transform_1(%arg0: i32) -> (i32, i32) {
    %c0_i32 = arith.constant 0 : i32
    %c0_i32_0 = arith.constant 0 : i32
    %c0_i32_1 = arith.constant 0 : i32
    return %c0_i32, %c0_i32_0 : i32, i32
  }
  func.func @transform_2(%arg0: i32) -> (i32, i32) {
    %c0_i32 = arith.constant 0 : i32
    %c0_i32_0 = arith.constant 0 : i32
    %c0_i32_1 = arith.constant 0 : i32
    return %c0_i32, %c0_i32_0 : i32, i32
  }
  func.func @transform_3(%arg0: i32) -> (i32, i32) {
    %c0_i32 = arith.constant 0 : i32
    %c0_i32_0 = arith.constant 0 : i32
    %c0_i32_1 = arith.constant 0 : i32
    return %c0_i32, %c0_i32_0 : i32, i32
  }
  func.func @transform_4(%arg0: i32) -> (i32, i32) {
    %c0_i32 = arith.constant 0 : i32
    %c0_i32_0 = arith.constant 0 : i32
    %c0_i32_1 = arith.constant 0 : i32
    return %c0_i32, %c0_i32_0 : i32, i32
  }
  func.func @transform_5(%arg0: i32) -> (i32, i32) {
    %c0_i32 = arith.constant 0 : i32
    %c0_i32_0 = arith.constant 0 : i32
    %c0_i32_1 = arith.constant 0 : i32
    return %c0_i32, %c0_i32_0 : i32, i32
  }
  func.func @transform_6(%arg0: i32) -> (i32, i32) {
    %c0_i32 = arith.constant 0 : i32
    %c0_i32_0 = arith.constant 0 : i32
    %c0_i32_1 = arith.constant 0 : i32
    return %c0_i32, %c0_i32_0 : i32, i32
  }
}

</mosaic_0001>

<llo_original>
// kernel: deepseek_v2_attention.1
$region0: #{deepseek_v2_attention.1}
  #allocation0 [shape = 'u32[]', space=smem, size = 0x4, offset = 0x4, fixed_abs, tag = 'smem constant byte address 0x4 - core index']
  #allocation1 [shape = 'u32[144,128]{1,0:T(1,128)}', space=vmem, size = 0x12000, scoped, tag = 'internal scratch']
  #allocation2 [shape = 'f32[16,64]{1,0:T(8,128)}', space=vmem, size = 0x2000, scoped, tag = 'scratch operand']
  %s0 = inlined_call_operand.vmem [shape: f32[16,64], index: 0, kind: input, shape index: {}]
  %s1 = inlined_call_operand.hbm [shape: f32[64,80], index: 1, kind: input, shape index: {}]
  %s2 = inlined_call_operand.vmem [shape: f32[1,80], index: 2, kind: input, shape index: {}]
  %s3 = inlined_call_operand.hbm [shape: f32[80,320], index: 3, kind: input, shape index: {}]
  %s4 = inlined_call_operand.hbm [shape: f32[16,256], index: 4, kind: input, shape index: {}]
  %s5 = inlined_call_operand.hbm [shape: f32[64,64], index: 5, kind: input, shape index: {}]
  %s6 = inlined_call_operand.hbm [shape: f32[16,64], index: 6, kind: output, shape index: {}]
  %s7 = sld [smem:[#allocation0]]
  $region50: #{deepseek_v2_attention.1} parent=0
    _
  %s9 = ssub.s32 1, %s7
  %s10 = scalar_select 0, %s9, %s7
  $region1: #{deepseek_v2_attention.1} parent=0
    #allocation3 [shape = 'u8[32768]{0}', space=vmem, size = 0x8000, scoped, tag = 'input window, operand 1, single buffered']
    #allocation4 [shape = 's32[1]{0}', space=sflag, size = 0x4, scoped, tag = 'scoped memory for deepseek_v2_attention.1']
    #allocation5 [shape = 's32[1]{0}', space=sflag, size = 0x4, scoped, tag = 'scoped memory for deepseek_v2_attention.1']
    #allocation6 [shape = 'u8[122880]{0}', space=vmem, size = 0x1e000, scoped, tag = 'input window, operand 3, single buffered']
    #allocation7 [shape = 's32[1]{0}', space=sflag, size = 0x4, scoped, tag = 'scoped memory for deepseek_v2_attention.1']
    #allocation8 [shape = 'u8[16384]{0}', space=vmem, size = 0x4000, scoped, tag = 'input window, operand 4, single buffered']
    #allocation9 [shape = 'u8[32768]{0}', space=vmem, size = 0x8000, scoped, tag = 'input window, operand 5, single buffered']
    #allocation10 [shape = 's32[1]{0}', space=sflag, size = 0x4, scoped, tag = 'scoped memory for deepseek_v2_attention.1']
    #allocation11 [shape = 'u8[8192]{0}', space=vmem, size = 0x2000, scoped, tag = 'output window, operand 0, single buffered']
    %11 = vsyncpa [#allocation4], 0
    %12 = vsyncpa [#allocation7], 0
    %13 = vsyncpa [#allocation10], 0
    %14 = vsyncpa [#allocation5], 0
    // Predicated region
    $region2: #{deepseek_v2_attention.1} parent=1 // pred_check
      _
    $region3: #{deepseek_v2_attention.1} parent=1 // pred_check_branch
      %16 = sbr.rel (0) target = $region5
    $region4: #{deepseek_v2_attention.1} parent=1 // pred_region
      _
    $region5: #{deepseek_v2_attention.1} parent=1 // pred_fallthru
      _
    // Predicated region
    $region6: #{deepseek_v2_attention.1} parent=1 // pred_check
      _
    $region7: #{deepseek_v2_attention.1} parent=1 // pred_check_branch
      %18 = sbr.rel (0) target = $region9
    $region8: #{deepseek_v2_attention.1} parent=1 // pred_region
      %s20 = ssub.s32 1024, 1024
      %21 = vsyncadd [#allocation4], %s20
      %s22 = sshll.u32 [#allocation3], 4
      %s23 = int_to_ptr.vmem [resolvable:$true] %s22
      %28 = dma.hbm_to_vmem [thread:$0]  %s1, 1024, %s23, [#allocation4], 128, 128, 8
    $region9: #{deepseek_v2_attention.1} parent=1 // pred_fallthru
      _
    // Predicated region
    $region10: #{deepseek_v2_attention.1} parent=1 // pred_check
      _
    $region11: #{deepseek_v2_attention.1} parent=1 // pred_check_branch
      %30 = sbr.rel (0) target = $region13
    $region12: #{deepseek_v2_attention.1} parent=1 // pred_region
      _
    $region13: #{deepseek_v2_attention.1} parent=1 // pred_fallthru
      _
    // Predicated region
    $region14: #{deepseek_v2_attention.1} parent=1 // pred_check
      _
    $region15: #{deepseek_v2_attention.1} parent=1 // pred_check_branch
      %32 = sbr.rel (0) target = $region17
    $region16: #{deepseek_v2_attention.1} parent=1 // pred_region
      %s34 = ssub.s32 3840, 3840
      %35 = vsyncadd [#allocation7], %s34
      %s36 = sshll.u32 [#allocation6], 4
      %s37 = int_to_ptr.vmem [resolvable:$true] %s36
      %42 = dma.hbm_to_vmem [thread:$0]  %s3, 3840, %s37, [#allocation7], 384, 384, 24
    $region17: #{deepseek_v2_attention.1} parent=1 // pred_fallthru
      _
    // Predicated region
    $region18: #{deepseek_v2_attention.1} parent=1 // pred_check
      _
    $region19: #{deepseek_v2_attention.1} parent=1 // pred_check_branch
      %44 = sbr.rel (0) target = $region21
    $region20: #{deepseek_v2_attention.1} parent=1 // pred_region
      %s46 = ssub.s32 512, 512
      %47 = vsyncadd [#allocation7], %s46
      %s48 = sshll.u32 [#allocation8], 4
      %s49 = int_to_ptr.vmem [resolvable:$true] %s48
      %54 = dma.hbm_to_vmem [thread:$0]  %s4, 512, %s49, [#allocation7], 256, 256, 16
    $region21: #{deepseek_v2_attention.1} parent=1 // pred_fallthru
      _
    // Predicated region
    $region22: #{deepseek_v2_attention.1} parent=1 // pred_check
      _
    $region23: #{deepseek_v2_attention.1} parent=1 // pred_check_branch
      %56 = sbr.rel (0) target = $region25
    $region24: #{deepseek_v2_attention.1} parent=1 // pred_region
      %s58 = ssub.s32 1024, 1024
      %59 = vsyncadd [#allocation10], %s58
      %s60 = sshll.u32 [#allocation9], 4
      %s61 = int_to_ptr.vmem [resolvable:$true] %s60
      %66 = dma.hbm_to_vmem [thread:$0]  %s5, 1024, %s61, [#allocation10], 128, 128, 8
    $region25: #{deepseek_v2_attention.1} parent=1 // pred_fallthru
      _
    // Predicated region
    $region26: #{deepseek_v2_attention.1} parent=1 // pred_check
      _
    $region27: #{deepseek_v2_attention.1} parent=1 // pred_check_branch
      %68 = sbr.rel (0) target = $region29
    $region28: #{deepseek_v2_attention.1} parent=1 // pred_region
      %69 = dma.done [#allocation4], 1024
    $region29: #{deepseek_v2_attention.1} parent=1 // pred_fallthru
      _
    // Predicated region
    $region30: #{deepseek_v2_attention.1} parent=1 // pred_check
      _
    $region31: #{deepseek_v2_attention.1} parent=1 // pred_check_branch
      %71 = sbr.rel (0) target = $region33
    $region32: #{deepseek_v2_attention.1} parent=1 // pred_region
      %72 = dma.done [#allocation7], 3840
    $region33: #{deepseek_v2_attention.1} parent=1 // pred_fallthru
      _
    // Predicated region
    $region34: #{deepseek_v2_attention.1} parent=1 // pred_check
      _
    $region35: #{deepseek_v2_attention.1} parent=1 // pred_check_branch
      %74 = sbr.rel (0) target = $region37
    $region36: #{deepseek_v2_attention.1} parent=1 // pred_region
      %75 = dma.done [#allocation7], 512
    $region37: #{deepseek_v2_attention.1} parent=1 // pred_fallthru
      _
    // Predicated region
    $region38: #{deepseek_v2_attention.1} parent=1 // pred_check
      _
    $region39: #{deepseek_v2_attention.1} parent=1 // pred_check_branch
      %77 = sbr.rel (0) target = $region41
    $region40: #{deepseek_v2_attention.1} parent=1 // pred_region
      %78 = dma.done [#allocation10], 1024
    $region41: #{deepseek_v2_attention.1} parent=1 // pred_fallthru
      _
    %v79 = vld [vmem:[%s0] sm:$0xff]
    %v80 = vld [vmem:[%s0 + $0x8] sm:$0xff]
    %v81 = vld [vmem:[#allocation3] sm:$0xff]
    %v82 = vld [vmem:[#allocation3 + $0x8] sm:$0xff]
    %v83 = vld [vmem:[#allocation3 + $0x10] sm:$0xff]
    %v84 = vld [vmem:[#allocation3 + $0x18] sm:$0xff]
    %v85 = vld [vmem:[#allocation3 + $0x20] sm:$0xff]
    %v86 = vld [vmem:[#allocation3 + $0x28] sm:$0xff]
    %v87 = vld [vmem:[#allocation3 + $0x30] sm:$0xff]
    %v88 = vld [vmem:[#allocation3 + $0x38] sm:$0xff]
    %vm89 = vcmask 523264
    %v91 = vsel %vm89, %v79, 0
    %v94 = vsel %vm89, %v80, 0
    %96 = vmatprep.subr.mxu0 0.0
    %97 = vmatpush1.msra.mxu0 %v81
    %98 = vmatprep.subr.mxu0 0.0
    %99 = vmatpush1.msra.mxu0 %v82
    %100 = vmatprep.subr.mxu0 0.0
    %101 = vmatpush1.msra.mxu0 %v83
    %102 = vmatprep.subr.mxu0 0.0
    %103 = vmatpush1.msra.mxu0 %v84
    %104 = vmatprep.subr.mxu0 0.0
    %105 = vmatpush1.msra.mxu0 %v85
    %106 = vmatprep.subr.mxu0 0.0
    %107 = vmatpush1.msra.mxu0 %v86
    %108 = vmatprep.subr.mxu0 0.0
    %109 = vmatpush1.msra.mxu0 %v87
    %110 = vmatprep.subr.mxu0 0.0
    %111 = vmatpush1.msra.mxu0 %v88
    %112 = vmatprep.subr.mxu0 0.0
    %113 = vmatpush1.msra.mxu0 0.0
    %114 = vmatprep.subr.mxu0 0.0
    %115 = vmatpush1.msra.mxu0 0.0
    %116 = vmatprep.subr.mxu0 0.0
    %117 = vmatpush1.msra.mxu0 0.0
    %118 = vmatprep.subr.mxu0 0.0
    %119 = vmatpush1.msra.mxu0 0.0
    %120 = vmatprep.subr.mxu0 0.0
    %121 = vmatpush1.msra.mxu0 0.0
    %122 = vmatprep.subr.mxu0 0.0
    %123 = vmatpush1.msra.mxu0 0.0
    %124 = vmatprep.subr.mxu0 0.0
    %125 = vmatpush1.msra.mxu0 0.0
    %126 = vmatprep.subr.mxu0 0.0
    %127 = vmatpush1.msra.mxu0 0.0
    %128 = vmatprep.subr.mxu0 0.0
    %129 = vmatpush1.msra.mxu0 0.0
    %130 = vmatprep.subr.mxu0 0.0
    %131 = vmatpush1.msra.mxu0 0.0
    %132 = vmatprep.subr.mxu0 0.0
    %133 = vmatpush1.msra.mxu0 0.0
    %134 = vmatprep.subr.mxu0 0.0
    %135 = vmatpush1.msra.mxu0 0.0
    %136 = vmatprep.subr.mxu0 0.0
    %137 = vmatpush1.msra.mxu0 0.0
    %138 = vmatprep.subr.mxu0 0.0
    %139 = vmatpush1.msra.mxu0 0.0
    %140 = vmatprep.subr.mxu0 0.0
    %141 = vmatpush1.msra.mxu0 0.0
    %142 = vmatprep.subr.mxu0 0.0
    %143 = vmatpush1.msra.mxu0 0.0
    %144 = vmatprep.subr.mxu0 0.0
    %145 = vmatpush1.msra.mxu0 0.0
    %146 = vmatprep.subr.mxu0 0.0
    %147 = vmatpush1.msra.mxu0 0.0
    %148 = vmatprep.subr.mxu0 0.0
    %149 = vmatpush1.msra.mxu0 0.0
    %150 = vmatprep.subr.mxu0 0.0
    %151 = vmatpush1.msra.mxu0 0.0
    %152 = vmatprep.subr.mxu0 0.0
    %153 = vmatpush1.msra.mxu0 0.0
    %154 = vmatprep.subr.mxu0 0.0
    %155 = vmatpush1.msra.mxu0 0.0
    %156 = vmatprep.subr.mxu0 0.0
    %157 = vmatpush1.msra.mxu0 0.0
    %158 = vmatprep.subr.mxu0 0.0
    %159 = vmatpush1.msra.mxu0 0.0
    %160 = vmatprep.mubr.f32.mxu0 0.0
    %161 = vmatmul.mubr.f32.gmra.mrb[0].mxu0 %v91
    %v162 = vpop.f32.mrb[0].mxu0
    %v163 = vadd.f32 0.0, %v162
    %v164 = vpop.f32.mrb[0].mxu0
    %165 = vmatprep.mubr.f32.mxu0 0.0
    %166 = vmatmul.mubr.f32.gmra.mrb[0].mxu0 %v94
    %v167 = vpop.f32.mrb[0].mxu0
    %v168 = vadd.f32 0.0, %v167
    %v169 = vpop.f32.mrb[0].mxu0
    %170 = vdwg.mxu0
    %v171 = vmul.f32 %v163, %v163
    %v172 = vmul.f32 %v168, %v168
    %vm173 = vcmask 261120
    %v174 = vsel %vm173, %v171, 0.0
    %175 = vadd.xlane.f32.xlu0 %v174
    %v176 = vpop.xlane.xlu0 %175
    %v177 = vsel %vm173, %v172, 0.0
    %178 = vadd.xlane.f32.xlu0 %v177
    %v179 = vpop.xlane.xlu0 %178
    %v180 = vrcp.pop 32.0
    %v181 = vmul.f32 %v176, %v180
    %v182 = vmul.f32 %v179, %v180
    %185 = vrot.lane.b32.xlu0 %v171, 96
    %v186 = vpop.permute.xlu0 %185
    %187 = vrot.lane.b32.xlu0 %v172, 96
    %v188 = vpop.permute.xlu0 %187
    %v191 = vsel %vm173, %v186, 0.0
    %192 = vadd.xlane.f32.xlu0 %v191
    %v193 = vpop.xlane.xlu0 %192
    %v194 = vsel %vm173, %v188, 0.0
    %195 = vadd.xlane.f32.xlu0 %v194
    %v196 = vpop.xlane.xlu0 %195
    %v197 = vmul.f32 %v193, %v180
    %v198 = vmul.f32 %v196, %v180
    %v199 = vlaneseq
    %v200 = vand.u32 %v199, 127
    %vm201 = vcmp.lt.s32.totalorder %v200, 32
    %v202 = vadd.f32 %v181, 1e-06
    %v203 = vadd.f32 %v182, 1e-06
    %v204 = vrsqrt.pop %v202
    %v205 = vrsqrt.pop %v203
    %vm206 = vcmp.lt.s32.totalorder %v200, 64
    %v207 = vadd.f32 %v197, 1e-06
    %v208 = vadd.f32 %v198, 1e-06
    %v209 = vrsqrt.pop %v207
    %v210 = vrsqrt.pop %v208
    %v211 = vsel %vm206, %v209, 1.0
    %v212 = vsel %vm206, %v210, 1.0
    %v213 = vsel %vm201, %v204, %v211
    %v214 = vsel %vm201, %v205, %v212
    %v215 = vmul.f32 %v163, %v213
    %v216 = vmul.f32 %v168, %v214
    %v217 = vld [vmem:[%s2] sm:$0x1]
    %v219 = vlaneseq
    %v220 = vshrl.u32 %v219, 7
    %v221 = vsub.s32 0, %v220
    %v222 = vrot.slane %v217, %v221
    %v224 = vmul.f32 %v215, %v222
    %v225 = vmul.f32 %v216, %v222
    %v226 = vld [vmem:[#allocation6] sm:$0xff]
    %v227 = vld [vmem:[#allocation6 + $0x8] sm:$0xff]
    %v228 = vld [vmem:[#allocation6 + $0x10] sm:$0xff]
    %v229 = vld [vmem:[#allocation6 + $0x18] sm:$0xff]
    %v230 = vld [vmem:[#allocation6 + $0x20] sm:$0xff]
    %v231 = vld [vmem:[#allocation6 + $0x28] sm:$0xff]
    %v232 = vld [vmem:[#allocation6 + $0x30] sm:$0xff]
    %v233 = vld [vmem:[#allocation6 + $0x38] sm:$0xff]
    %v234 = vld [vmem:[#allocation6 + $0x40] sm:$0xff]
    %v235 = vld [vmem:[#allocation6 + $0x48] sm:$0xff]
    %v236 = vld [vmem:[#allocation6 + $0x50] sm:$0xff]
    %v237 = vld [vmem:[#allocation6 + $0x58] sm:$0xff]
    %v238 = vld [vmem:[#allocation6 + $0x60] sm:$0xff]
    %v239 = vld [vmem:[#allocation6 + $0x68] sm:$0xff]
    %v240 = vld [vmem:[#allocation6 + $0x70] sm:$0xff]
    %v241 = vld [vmem:[#allocation6 + $0x78] sm:$0xff]
    %v242 = vld [vmem:[#allocation6 + $0x80] sm:$0xff]
    %v243 = vld [vmem:[#allocation6 + $0x88] sm:$0xff]
    %v244 = vld [vmem:[#allocation6 + $0x90] sm:$0xff]
    %v245 = vld [vmem:[#allocation6 + $0x98] sm:$0xff]
    %v246 = vld [vmem:[#allocation6 + $0xa0] sm:$0xff]
    %v247 = vld [vmem:[#allocation6 + $0xa8] sm:$0xff]
    %v248 = vld [vmem:[#allocation6 + $0xb0] sm:$0xff]
    %v249 = vld [vmem:[#allocation6 + $0xb8] sm:$0xff]
    %v250 = vld [vmem:[#allocation6 + $0xc0] sm:$0xff]
    %v251 = vld [vmem:[#allocation6 + $0xc8] sm:$0xff]
    %v252 = vld [vmem:[#allocation6 + $0xd0] sm:$0xff]
    %v253 = vld [vmem:[#allocation6 + $0xd8] sm:$0xff]
    %v254 = vld [vmem:[#allocation6 + $0xe0] sm:$0xff]
    %v255 = vld [vmem:[#allocation6 + $0xe8] sm:$0xff]
    %vm256 = vcmask 654336
    %v258 = vsel %vm256, %v224, 0
    %v261 = vsel %vm256, %v225, 0
    %263 = vmatprep.subr.mxu0 %v227
    %264 = vmatpush1.msra.mxu0 %v226
    %265 = vmatprep.subr.mxu0 %v230
    %266 = vmatpush1.msra.mxu0 %v229
    %267 = vmatprep.subr.mxu0 %v233
    %268 = vmatpush1.msra.mxu0 %v232
    %269 = vmatprep.subr.mxu0 %v236
    %270 = vmatpush1.msra.mxu0 %v235
    %271 = vmatprep.subr.mxu0 %v239
    %272 = vmatpush1.msra.mxu0 %v238
    %273 = vmatprep.subr.mxu0 %v242
    %274 = vmatpush1.msra.mxu0 %v241
    %275 = vmatprep.subr.mxu0 %v245
    %276 = vmatpush1.msra.mxu0 %v244
    %277 = vmatprep.subr.mxu0 %v248
    %278 = vmatpush1.msra.mxu0 %v247
    %279 = vmatprep.subr.mxu0 %v251
    %280 = vmatpush1.msra.mxu0 %v250
    %281 = vmatprep.subr.mxu0 %v254
    %282 = vmatpush1.msra.mxu0 %v253
    %283 = vmatprep.subr.mxu0 0.0
    %284 = vmatpush1.msra.mxu0 0.0
    %285 = vmatprep.subr.mxu0 0.0
    %286 = vmatpush1.msra.mxu0 0.0
    %287 = vmatprep.subr.mxu0 0.0
    %288 = vmatpush1.msra.mxu0 0.0
    %289 = vmatprep.subr.mxu0 0.0
    %290 = vmatpush1.msra.mxu0 0.0
    %291 = vmatprep.subr.mxu0 0.0
    %292 = vmatpush1.msra.mxu0 0.0
    %293 = vmatprep.subr.mxu0 0.0
    %294 = vmatpush1.msra.mxu0 0.0
    %295 = vmatprep.subr.mxu0 0.0
    %296 = vmatpush1.msra.mxu0 0.0
    %297 = vmatprep.subr.mxu0 0.0
    %298 = vmatpush1.msra.mxu0 0.0
    %299 = vmatprep.subr.mxu0 0.0
    %300 = vmatpush1.msra.mxu0 0.0
    %301 = vmatprep.subr.mxu0 0.0
    %302 = vmatpush1.msra.mxu0 0.0
    %303 = vmatprep.subr.mxu0 0.0
    %304 = vmatpush1.msra.mxu0 0.0
    %305 = vmatprep.subr.mxu0 0.0
    %306 = vmatpush1.msra.mxu0 0.0
    %307 = vmatprep.subr.mxu0 0.0
    %308 = vmatpush1.msra.mxu0 0.0
    %309 = vmatprep.subr.mxu0 0.0
    %310 = vmatpush1.msra.mxu0 0.0
    %311 = vmatprep.subr.mxu0 0.0
    %312 = vmatpush1.msra.mxu0 0.0
    %313 = vmatprep.subr.mxu0 0.0
    %314 = vmatpush1.msra.mxu0 0.0
    %315 = vmatprep.subr.mxu0 0.0
    %316 = vmatpush1.msra.mxu0 0.0
    %317 = vmatprep.subr.mxu0 0.0
    %318 = vmatpush1.msra.mxu0 0.0
    %319 = vmatprep.subr.mxu0 0.0
    %320 = vmatpush1.msra.mxu0 0.0
    %321 = vmatprep.subr.mxu0 0.0
    %322 = vmatpush1.msra.mxu0 0.0
    %323 = vmatprep.subr.mxu0 0.0
    %324 = vmatpush1.msra.mxu0 0.0
    %325 = vmatprep.subr.mxu0 0.0
    %326 = vmatpush1.msra.mxu0 0.0
    %327 = vmatprep.mubr.f32.mxu0 0.0
    %328 = vmatmul.mubr.f32.gmra.mrb[0].mxu0 %v258
    %v329 = vpop.f32.mrb[0].mxu0
    %v330 = vadd.f32 0.0, %v329
    %v331 = vpop.f32.mrb[0].mxu0
    %v332 = vadd.f32 0.0, %v331
    %333 = vmatprep.mubr.f32.mxu0 0.0
    %334 = vmatmul.mubr.f32.gmra.mrb[0].mxu0 %v261
    %v335 = vpop.f32.mrb[0].mxu0
    %v336 = vadd.f32 0.0, %v335
    %v337 = vpop.f32.mrb[0].mxu0
    %v338 = vadd.f32 0.0, %v337
    %339 = vdwg.mxu0
    %340 = vmatprep.subr.mxu0 0.0
    %341 = vmatpush1.msra.mxu0 %v228
    %342 = vmatprep.subr.mxu0 0.0
    %343 = vmatpush1.msra.mxu0 %v231
    %344 = vmatprep.subr.mxu0 0.0
    %345 = vmatpush1.msra.mxu0 %v234
    %346 = vmatprep.subr.mxu0 0.0
    %347 = vmatpush1.msra.mxu0 %v237
    %348 = vmatprep.subr.mxu0 0.0
    %349 = vmatpush1.msra.mxu0 %v240
    %350 = vmatprep.subr.mxu0 0.0
    %351 = vmatpush1.msra.mxu0 %v243
    %352 = vmatprep.subr.mxu0 0.0
    %353 = vmatpush1.msra.mxu0 %v246
    %354 = vmatprep.subr.mxu0 0.0
    %355 = vmatpush1.msra.mxu0 %v249
    %356 = vmatprep.subr.mxu0 0.0
    %357 = vmatpush1.msra.mxu0 %v252
    %358 = vmatprep.subr.mxu0 0.0
    %359 = vmatpush1.msra.mxu0 %v255
    %360 = vmatprep.subr.mxu0 0.0
    %361 = vmatpush1.msra.mxu0 0.0
    %362 = vmatprep.subr.mxu0 0.0
    %363 = vmatpush1.msra.mxu0 0.0
    %364 = vmatprep.subr.mxu0 0.0
    %365 = vmatpush1.msra.mxu0 0.0
    %366 = vmatprep.subr.mxu0 0.0
    %367 = vmatpush1.msra.mxu0 0.0
    %368 = vmatprep.subr.mxu0 0.0
    %369 = vmatpush1.msra.mxu0 0.0
    %370 = vmatprep.subr.mxu0 0.0
    %371 = vmatpush1.msra.mxu0 0.0
    %372 = vmatprep.subr.mxu0 0.0
    %373 = vmatpush1.msra.mxu0 0.0
    %374 = vmatprep.subr.mxu0 0.0
    %375 = vmatpush1.msra.mxu0 0.0
    %376 = vmatprep.subr.mxu0 0.0
    %377 = vmatpush1.msra.mxu0 0.0
    %378 = vmatprep.subr.mxu0 0.0
    %379 = vmatpush1.msra.mxu0 0.0
    %380 = vmatprep.subr.mxu0 0.0
    %381 = vmatpush1.msra.mxu0 0.0
    %382 = vmatprep.subr.mxu0 0.0
    %383 = vmatpush1.msra.mxu0 0.0
    %384 = vmatprep.subr.mxu0 0.0
    %385 = vmatpush1.msra.mxu0 0.0
    %386 = vmatprep.subr.mxu0 0.0
    %387 = vmatpush1.msra.mxu0 0.0
    %388 = vmatprep.subr.mxu0 0.0
    %389 = vmatpush1.msra.mxu0 0.0
    %390 = vmatprep.subr.mxu0 0.0
    %391 = vmatpush1.msra.mxu0 0.0
    %392 = vmatprep.subr.mxu0 0.0
    %393 = vmatpush1.msra.mxu0 0.0
    %394 = vmatprep.subr.mxu0 0.0
    %395 = vmatpush1.msra.mxu0 0.0
    %396 = vmatprep.subr.mxu0 0.0
    %397 = vmatpush1.msra.mxu0 0.0
    %398 = vmatprep.subr.mxu0 0.0
    %399 = vmatpush1.msra.mxu0 0.0
    %400 = vmatprep.subr.mxu0 0.0
    %401 = vmatpush1.msra.mxu0 0.0
    %402 = vmatprep.subr.mxu0 0.0
    %403 = vmatpush1.msra.mxu0 0.0
    %404 = vmatprep.mubr.f32.mxu0 0.0
    %405 = vmatmul.mubr.f32.gmra.mrb[0].mxu0 %v258
    %v406 = vpop.f32.mrb[0].mxu0
    %v407 = vadd.f32 0.0, %v406
    %v408 = vpop.f32.mrb[0].mxu0
    %409 = vmatprep.mubr.f32.mxu0 0.0
    %410 = vmatmul.mubr.f32.gmra.mrb[0].mxu0 %v261
    %v411 = vpop.f32.mrb[0].mxu0
    %v412 = vadd.f32 0.0, %v411
    %v413 = vpop.f32.mrb[0].mxu0
    %414 = vdwg.mxu0
    %v415 = vld [vmem:[#allocation8] sm:$0xff]
    %v416 = vld [vmem:[#allocation8 + $0x8] sm:$0xff]
    %v417 = vld [vmem:[#allocation8 + $0x10] sm:$0xff]
    %v418 = vld [vmem:[#allocation8 + $0x18] sm:$0xff]
    %vm419 = vcmp.lt.s32.totalorder %v200, 0
    %v420 = vsub.s32 0, %v200
    %v421 = vsel %vm419, %v420, %v200
    %v422 = vshrl.u32 %v421, 5
    %v423 = vand.u32 %v421, 31
    %v424 = vsub.s32 0, %v423
    %v425 = vsel %vm419, %v424, %v423
    %vm426 = vcmp.ne.s32.totalorder %v425, 0
    %vm427 = vcmp.lt.s32.totalorder %v425, 0
    %vm428 = vmand %vm427, %vm426
    %v429 = vadd.s32 %v425, 32
    %v430 = vsel %vm428, %v429, %v425
    %vm431 = vcmp.ge.s32.totalorder %v430, 16
    %v432 = vsel %vm431, %v330, 0.0
    %v433 = vsel %vm431, %v336, 0.0
    %434 = vrot.lane.b32.xlu0 %v432, 8
    %v435 = vpop.permute.xlu0 %434
    %436 = vrot.lane.b32.xlu0 %v433, 8
    %v437 = vpop.permute.xlu0 %436
    %438 = vrot.lane.b32.xlu0 %v432, 120
    %v439 = vpop.permute.xlu0 %438
    %440 = vrot.lane.b32.xlu0 %v433, 120
    %v441 = vpop.permute.xlu0 %440
    %v442 = vadd.f32 %v435, %v439
    %v443 = vadd.f32 %v437, %v441
    %v444 = vmul.f32 %v330, %v415
    %v445 = vmul.f32 %v336, %v417
    %v446 = vmul.f32 %v442, %v416
    %v447 = vmul.f32 %v443, %v418
    %v448 = vadd.f32 %v444, %v446
    %v449 = vadd.f32 %v445, %v447
    %v450 = vsel %vm431, %v332, 0.0
    %v451 = vsel %vm431, %v338, 0.0
    %452 = vrot.lane.b32.xlu0 %v450, 8
    %v453 = vpop.permute.xlu0 %452
    %454 = vrot.lane.b32.xlu0 %v451, 8
    %v455 = vpop.permute.xlu0 %454
    %456 = vrot.lane.b32.xlu0 %v450, 120
    %v457 = vpop.permute.xlu0 %456
    %458 = vrot.lane.b32.xlu0 %v451, 120
    %v459 = vpop.permute.xlu0 %458
    %v460 = vadd.f32 %v453, %v457
    %v461 = vadd.f32 %v455, %v459
    %v462 = vmul.f32 %v332, %v415
    %v463 = vmul.f32 %v338, %v417
    %v464 = vmul.f32 %v460, %v416
    %v465 = vmul.f32 %v461, %v418
    %v466 = vadd.f32 %v462, %v464
    %v467 = vadd.f32 %v463, %v465
    %v469 = vsel %vm173, %v448, 0
    %v472 = vsel %vm173, %v466, 0
    %474 = vmatprep.subr.mxu0 0.0
    %475 = vmatpush1.xpose.msra.mxu0 %v472
    %476 = vmatprep.subr.mxu0 0.0
    %477 = vmatpush1.xpose.msra.mxu0 0.0
    %478 = vmatprep.subr.mxu0 0.0
    %479 = vmatpush1.xpose.msra.mxu0 0.0
    %480 = vmatprep.subr.mxu0 0.0
    %481 = vmatpush1.xpose.msra.mxu0 0.0
    %482 = vmatprep.subr.mxu0 0.0
    %483 = vmatpush1.xpose.msra.mxu0 0.0
    %484 = vmatprep.subr.mxu0 0.0
    %485 = vmatpush1.xpose.msra.mxu0 0.0
    %486 = vmatprep.subr.mxu0 0.0
    %487 = vmatpush1.xpose.msra.mxu0 0.0
    %488 = vmatprep.subr.mxu0 0.0
    %489 = vmatpush1.xpose.msra.mxu0 0.0
    %490 = vmatprep.subr.mxu0 0.0
    %491 = vmatpush1.xpose.msra.mxu0 0.0
    %492 = vmatprep.subr.mxu0 0.0
    %493 = vmatpush1.xpose.msra.mxu0 0.0
    %494 = vmatprep.subr.mxu0 0.0
    %495 = vmatpush1.xpose.msra.mxu0 0.0
    %496 = vmatprep.subr.mxu0 0.0
    %497 = vmatpush1.xpose.msra.mxu0 0.0
    %498 = vmatprep.subr.mxu0 0.0
    %499 = vmatpush1.xpose.msra.mxu0 0.0
    %500 = vmatprep.subr.mxu0 0.0
    %501 = vmatpush1.xpose.msra.mxu0 0.0
    %502 = vmatprep.subr.mxu0 0.0
    %503 = vmatpush1.xpose.msra.mxu0 0.0
    %504 = vmatprep.subr.mxu0 0.0
    %505 = vmatpush1.xpose.msra.mxu0 0.0
    %506 = vmatprep.subr.mxu0 0.0
    %507 = vmatpush1.xpose.msra.mxu0 0.0
    %508 = vmatprep.subr.mxu0 0.0
    %509 = vmatpush1.xpose.msra.mxu0 0.0
    %510 = vmatprep.subr.mxu0 0.0
    %511 = vmatpush1.xpose.msra.mxu0 0.0
    %512 = vmatprep.subr.mxu0 0.0
    %513 = vmatpush1.xpose.msra.mxu0 0.0
    %514 = vmatprep.subr.mxu0 0.0
    %515 = vmatpush1.xpose.msra.mxu0 0.0
    %516 = vmatprep.subr.mxu0 0.0
    %517 = vmatpush1.xpose.msra.mxu0 0.0
    %518 = vmatprep.subr.mxu0 0.0
    %519 = vmatpush1.xpose.msra.mxu0 0.0
    %520 = vmatprep.subr.mxu0 0.0
    %521 = vmatpush1.xpose.msra.mxu0 0.0
    %522 = vmatprep.subr.mxu0 0.0
    %523 = vmatpush1.xpose.msra.mxu0 0.0
    %524 = vmatprep.subr.mxu0 0.0
    %525 = vmatpush1.xpose.msra.mxu0 0.0
    %526 = vmatprep.subr.mxu0 0.0
    %527 = vmatpush1.xpose.msra.mxu0 0.0
    %528 = vmatprep.subr.mxu0 0.0
    %529 = vmatpush1.xpose.msra.mxu0 0.0
    %530 = vmatprep.subr.mxu0 0.0
    %531 = vmatpush1.xpose.msra.mxu0 0.0
    %532 = vmatprep.subr.mxu0 0.0
    %533 = vmatpush1.xpose.msra.mxu0 0.0
    %534 = vmatprep.subr.mxu0 0.0
    %535 = vmatpush1.xpose.msra.mxu0 0.0
    %536 = vmatprep.subr.mxu0 0.0
    %537 = vmatpush1.xpose.msra.mxu0 0.0
    %538 = vmatprep.mubr.f32.mxu0 0.0
    %539 = vmatmul.mubr.f32.gmra.mrb[0].mxu0 %v469
    %v540 = vpop.f32.mrb[0].mxu0
    %v541 = vadd.f32 0.0, %v540
    %v542 = vpop.f32.mrb[0].mxu0
    %543 = vdwg.mxu0
    %vm544 = vcmask 64512
    %v545 = vsel %vm544, %v541, -inf
    %546 = vmax.xlane.f32.xlu0 %v545
    %v547 = vpop.xlane.xlu0 %546
    %v548 = vsub.f32 %v541, %v547
    %v549 = vmul.f32 %v548, 1.442695
    %v550 = vpow.pop %v549
    %v551 = vsel %vm544, %v550, 0.0
    %552 = vadd.xlane.f32.xlu0 %v551
    %v553 = vpop.xlane.xlu0 %552
    %v554 = vrcp.pop %v553
    %v555 = vmul.f32 %v550, %v554
    %v557 = vsel %vm544, %v555, 0
    %559 = vmatprep.subr.mxu0 0.0
    %560 = vmatpush1.msra.mxu0 %v407
    %561 = vmatprep.subr.mxu0 0.0
    %562 = vmatpush1.msra.mxu0 0.0
    %563 = vmatprep.subr.mxu0 0.0
    %564 = vmatpush1.msra.mxu0 0.0
    %565 = vmatprep.subr.mxu0 0.0
    %566 = vmatpush1.msra.mxu0 0.0
    %567 = vmatprep.subr.mxu0 0.0
    %568 = vmatpush1.msra.mxu0 0.0
    %569 = vmatprep.subr.mxu0 0.0
    %570 = vmatpush1.msra.mxu0 0.0
    %571 = vmatprep.subr.mxu0 0.0
    %572 = vmatpush1.msra.mxu0 0.0
    %573 = vmatprep.subr.mxu0 0.0
    %574 = vmatpush1.msra.mxu0 0.0
    %575 = vmatprep.subr.mxu0 0.0
    %576 = vmatpush1.msra.mxu0 0.0
    %577 = vmatprep.subr.mxu0 0.0
    %578 = vmatpush1.msra.mxu0 0.0
    %579 = vmatprep.subr.mxu0 0.0
    %580 = vmatpush1.msra.mxu0 0.0
    %581 = vmatprep.subr.mxu0 0.0
    %582 = vmatpush1.msra.mxu0 0.0
    %583 = vmatprep.subr.mxu0 0.0
    %584 = vmatpush1.msra.mxu0 0.0
    %585 = vmatprep.subr.mxu0 0.0
    %586 = vmatpush1.msra.mxu0 0.0
    %587 = vmatprep.subr.mxu0 0.0
    %588 = vmatpush1.msra.mxu0 0.0
    %589 = vmatprep.subr.mxu0 0.0
    %590 = vmatpush1.msra.mxu0 0.0
    %591 = vmatprep.subr.mxu0 0.0
    %592 = vmatpush1.msra.mxu0 0.0
    %593 = vmatprep.subr.mxu0 0.0
    %594 = vmatpush1.msra.mxu0 0.0
    %595 = vmatprep.subr.mxu0 0.0
    %596 = vmatpush1.msra.mxu0 0.0
    %597 = vmatprep.subr.mxu0 0.0
    %598 = vmatpush1.msra.mxu0 0.0
    %599 = vmatprep.subr.mxu0 0.0
    %600 = vmatpush1.msra.mxu0 0.0
    %601 = vmatprep.subr.mxu0 0.0
    %602 = vmatpush1.msra.mxu0 0.0
    %603 = vmatprep.subr.mxu0 0.0
    %604 = vmatpush1.msra.mxu0 0.0
    %605 = vmatprep.subr.mxu0 0.0
    %606 = vmatpush1.msra.mxu0 0.0
    %607 = vmatprep.subr.mxu0 0.0
    %608 = vmatpush1.msra.mxu0 0.0
    %609 = vmatprep.subr.mxu0 0.0
    %610 = vmatpush1.msra.mxu0 0.0
    %611 = vmatprep.subr.mxu0 0.0
    %612 = vmatpush1.msra.mxu0 0.0
    %613 = vmatprep.subr.mxu0 0.0
    %614 = vmatpush1.msra.mxu0 0.0
    %615 = vmatprep.subr.mxu0 0.0
    %616 = vmatpush1.msra.mxu0 0.0
    %617 = vmatprep.subr.mxu0 0.0
    %618 = vmatpush1.msra.mxu0 0.0
    %619 = vmatprep.subr.mxu0 0.0
    %620 = vmatpush1.msra.mxu0 0.0
    %621 = vmatprep.subr.mxu0 0.0
    %622 = vmatpush1.msra.mxu0 0.0
    %623 = vmatprep.mubr.f32.mxu0 0.0
    %624 = vmatmul.mubr.f32.gmra.mrb[0].mxu0 %v557
    %v625 = vpop.f32.mrb[0].mxu0
    %v626 = vadd.f32 0.0, %v625
    %v627 = vpop.f32.mrb[0].mxu0
    %628 = vdwg.mxu0
    %vm629 = vcmask 130048
    %630 = vst.msk [vmem:[#allocation2] sm:$0xff] %vm629, %v626
    %631 = vrot.lane.b32.xlu0 %v448, 96
    %v632 = vpop.permute.xlu0 %631
    %633 = vrot.lane.b32.xlu0 %v466, 96
    %v634 = vpop.permute.xlu0 %633
    %v635 = vsel %vm173, %v632, 0
    %v637 = vsel %vm173, %v634, 0
    %639 = vmatprep.subr.mxu0 0.0
    %640 = vmatpush1.xpose.msra.mxu0 %v637
    %641 = vmatprep.subr.mxu0 0.0
    %642 = vmatpush1.xpose.msra.mxu0 0.0
    %643 = vmatprep.subr.mxu0 0.0
    %644 = vmatpush1.xpose.msra.mxu0 0.0
    %645 = vmatprep.subr.mxu0 0.0
    %646 = vmatpush1.xpose.msra.mxu0 0.0
    %647 = vmatprep.subr.mxu0 0.0
    %648 = vmatpush1.xpose.msra.mxu0 0.0
    %649 = vmatprep.subr.mxu0 0.0
    %650 = vmatpush1.xpose.msra.mxu0 0.0
    %651 = vmatprep.subr.mxu0 0.0
    %652 = vmatpush1.xpose.msra.mxu0 0.0
    %653 = vmatprep.subr.mxu0 0.0
    %654 = vmatpush1.xpose.msra.mxu0 0.0
    %655 = vmatprep.subr.mxu0 0.0
    %656 = vmatpush1.xpose.msra.mxu0 0.0
    %657 = vmatprep.subr.mxu0 0.0
    %658 = vmatpush1.xpose.msra.mxu0 0.0
    %659 = vmatprep.subr.mxu0 0.0
    %660 = vmatpush1.xpose.msra.mxu0 0.0
    %661 = vmatprep.subr.mxu0 0.0
    %662 = vmatpush1.xpose.msra.mxu0 0.0
    %663 = vmatprep.subr.mxu0 0.0
    %664 = vmatpush1.xpose.msra.mxu0 0.0
    %665 = vmatprep.subr.mxu0 0.0
    %666 = vmatpush1.xpose.msra.mxu0 0.0
    %667 = vmatprep.subr.mxu0 0.0
    %668 = vmatpush1.xpose.msra.mxu0 0.0
    %669 = vmatprep.subr.mxu0 0.0
    %670 = vmatpush1.xpose.msra.mxu0 0.0
    %671 = vmatprep.subr.mxu0 0.0
    %672 = vmatpush1.xpose.msra.mxu0 0.0
    %673 = vmatprep.subr.mxu0 0.0
    %674 = vmatpush1.xpose.msra.mxu0 0.0
    %675 = vmatprep.subr.mxu0 0.0
    %676 = vmatpush1.xpose.msra.mxu0 0.0
    %677 = vmatprep.subr.mxu0 0.0
    %678 = vmatpush1.xpose.msra.mxu0 0.0
    %679 = vmatprep.subr.mxu0 0.0
    %680 = vmatpush1.xpose.msra.mxu0 0.0
    %681 = vmatprep.subr.mxu0 0.0
    %682 = vmatpush1.xpose.msra.mxu0 0.0
    %683 = vmatprep.subr.mxu0 0.0
    %684 = vmatpush1.xpose.msra.mxu0 0.0
    %685 = vmatprep.subr.mxu0 0.0
    %686 = vmatpush1.xpose.msra.mxu0 0.0
    %687 = vmatprep.subr.mxu0 0.0
    %688 = vmatpush1.xpose.msra.mxu0 0.0
    %689 = vmatprep.subr.mxu0 0.0
    %690 = vmatpush1.xpose.msra.mxu0 0.0
    %691 = vmatprep.subr.mxu0 0.0
    %692 = vmatpush1.xpose.msra.mxu0 0.0
    %693 = vmatprep.subr.mxu0 0.0
    %694 = vmatpush1.xpose.msra.mxu0 0.0
    %695 = vmatprep.subr.mxu0 0.0
    %696 = vmatpush1.xpose.msra.mxu0 0.0
    %697 = vmatprep.subr.mxu0 0.0
    %698 = vmatpush1.xpose.msra.mxu0 0.0
    %699 = vmatprep.subr.mxu0 0.0
    %700 = vmatpush1.xpose.msra.mxu0 0.0
    %701 = vmatprep.subr.mxu0 0.0
    %702 = vmatpush1.xpose.msra.mxu0 0.0
    %703 = vmatprep.mubr.f32.mxu0 0.0
    %704 = vmatmul.mubr.f32.gmra.mrb[0].mxu0 %v635
    %v705 = vpop.f32.mrb[0].mxu0
    %v706 = vadd.f32 0.0, %v705
    %v707 = vpop.f32.mrb[0].mxu0
    %708 = vdwg.mxu0
    %v709 = vsel %vm544, %v706, -inf
    %710 = vmax.xlane.f32.xlu0 %v709
    %v711 = vpop.xlane.xlu0 %710
    %v712 = vsub.f32 %v706, %v711
    %v713 = vmul.f32 %v712, 1.442695
    %v714 = vpow.pop %v713
    %v715 = vsel %vm544, %v714, 0.0
    %716 = vadd.xlane.f32.xlu0 %v715
    %v717 = vpop.xlane.xlu0 %716
    %v718 = vrcp.pop %v717
    %v719 = vmul.f32 %v714, %v718
    %721 = vrot.lane.b32.xlu0 %v407, 112
    %v722 = vpop.permute.xlu0 %721
    %v725 = vsel %vm544, %v719, 0
    %727 = vmatprep.subr.mxu0 0.0
    %728 = vmatpush1.msra.mxu0 %v722
    %729 = vmatprep.subr.mxu0 0.0
    %730 = vmatpush1.msra.mxu0 0.0
    %731 = vmatprep.subr.mxu0 0.0
    %732 = vmatpush1.msra.mxu0 0.0
    %733 = vmatprep.subr.mxu0 0.0
    %734 = vmatpush1.msra.mxu0 0.0
    %735 = vmatprep.subr.mxu0 0.0
    %736 = vmatpush1.msra.mxu0 0.0
    %737 = vmatprep.subr.mxu0 0.0
    %738 = vmatpush1.msra.mxu0 0.0
    %739 = vmatprep.subr.mxu0 0.0
    %740 = vmatpush1.msra.mxu0 0.0
    %741 = vmatprep.subr.mxu0 0.0
    %742 = vmatpush1.msra.mxu0 0.0
    %743 = vmatprep.subr.mxu0 0.0
    %744 = vmatpush1.msra.mxu0 0.0
    %745 = vmatprep.subr.mxu0 0.0
    %746 = vmatpush1.msra.mxu0 0.0
    %747 = vmatprep.subr.mxu0 0.0
    %748 = vmatpush1.msra.mxu0 0.0
    %749 = vmatprep.subr.mxu0 0.0
    %750 = vmatpush1.msra.mxu0 0.0
    %751 = vmatprep.subr.mxu0 0.0
    %752 = vmatpush1.msra.mxu0 0.0
    %753 = vmatprep.subr.mxu0 0.0
    %754 = vmatpush1.msra.mxu0 0.0
    %755 = vmatprep.subr.mxu0 0.0
    %756 = vmatpush1.msra.mxu0 0.0
    %757 = vmatprep.subr.mxu0 0.0
    %758 = vmatpush1.msra.mxu0 0.0
    %759 = vmatprep.subr.mxu0 0.0
    %760 = vmatpush1.msra.mxu0 0.0
    %761 = vmatprep.subr.mxu0 0.0
    %762 = vmatpush1.msra.mxu0 0.0
    %763 = vmatprep.subr.mxu0 0.0
    %764 = vmatpush1.msra.mxu0 0.0
    %765 = vmatprep.subr.mxu0 0.0
    %766 = vmatpush1.msra.mxu0 0.0
    %767 = vmatprep.subr.mxu0 0.0
    %768 = vmatpush1.msra.mxu0 0.0
    %769 = vmatprep.subr.mxu0 0.0
    %770 = vmatpush1.msra.mxu0 0.0
    %771 = vmatprep.subr.mxu0 0.0
    %772 = vmatpush1.msra.mxu0 0.0
    %773 = vmatprep.subr.mxu0 0.0
    %774 = vmatpush1.msra.mxu0 0.0
    %775 = vmatprep.subr.mxu0 0.0
    %776 = vmatpush1.msra.mxu0 0.0
    %777 = vmatprep.subr.mxu0 0.0
    %778 = vmatpush1.msra.mxu0 0.0
    %779 = vmatprep.subr.mxu0 0.0
    %780 = vmatpush1.msra.mxu0 0.0
    %781 = vmatprep.subr.mxu0 0.0
    %782 = vmatpush1.msra.mxu0 0.0
    %783 = vmatprep.subr.mxu0 0.0
    %784 = vmatpush1.msra.mxu0 0.0
    %785 = vmatprep.subr.mxu0 0.0
    %786 = vmatpush1.msra.mxu0 0.0
    %787 = vmatprep.subr.mxu0 0.0
    %788 = vmatpush1.msra.mxu0 0.0
    %789 = vmatprep.subr.mxu0 0.0
    %790 = vmatpush1.msra.mxu0 0.0
    %791 = vmatprep.mubr.f32.mxu0 0.0
    %792 = vmatmul.mubr.f32.gmra.mrb[0].mxu0 %v725
    %v793 = vpop.f32.mrb[0].mxu0
    %v794 = vadd.f32 0.0, %v793
    %v795 = vpop.f32.mrb[0].mxu0
    %796 = vdwg.mxu0
    %798 = vrot.lane.b32.xlu0 %v794, 16
    %v799 = vpop.permute.xlu0 %798
    %vm801 = vcmask 261248
    %802 = vst.msk [vmem:[#allocation2] sm:$0xff] %vm801, %v799
    %803 = vrot.lane.b32.xlu0 %v448, 64
    %v804 = vpop.permute.xlu0 %803
    %805 = vrot.lane.b32.xlu0 %v466, 64
    %v806 = vpop.permute.xlu0 %805
    %v807 = vsel %vm173, %v804, 0
    %v809 = vsel %vm173, %v806, 0
    %811 = vmatprep.subr.mxu0 0.0
    %812 = vmatpush1.xpose.msra.mxu0 %v809
    %813 = vmatprep.subr.mxu0 0.0
    %814 = vmatpush1.xpose.msra.mxu0 0.0
    %815 = vmatprep.subr.mxu0 0.0
    %816 = vmatpush1.xpose.msra.mxu0 0.0
    %817 = vmatprep.subr.mxu0 0.0
    %818 = vmatpush1.xpose.msra.mxu0 0.0
    %819 = vmatprep.subr.mxu0 0.0
    %820 = vmatpush1.xpose.msra.mxu0 0.0
    %821 = vmatprep.subr.mxu0 0.0
    %822 = vmatpush1.xpose.msra.mxu0 0.0
    %823 = vmatprep.subr.mxu0 0.0
    %824 = vmatpush1.xpose.msra.mxu0 0.0
    %825 = vmatprep.subr.mxu0 0.0
    %826 = vmatpush1.xpose.msra.mxu0 0.0
    %827 = vmatprep.subr.mxu0 0.0
    %828 = vmatpush1.xpose.msra.mxu0 0.0
    %829 = vmatprep.subr.mxu0 0.0
    %830 = vmatpush1.xpose.msra.mxu0 0.0
    %831 = vmatprep.subr.mxu0 0.0
    %832 = vmatpush1.xpose.msra.mxu0 0.0
    %833 = vmatprep.subr.mxu0 0.0
    %834 = vmatpush1.xpose.msra.mxu0 0.0
    %835 = vmatprep.subr.mxu0 0.0
    %836 = vmatpush1.xpose.msra.mxu0 0.0
    %837 = vmatprep.subr.mxu0 0.0
    %838 = vmatpush1.xpose.msra.mxu0 0.0
    %839 = vmatprep.subr.mxu0 0.0
    %840 = vmatpush1.xpose.msra.mxu0 0.0
    %841 = vmatprep.subr.mxu0 0.0
    %842 = vmatpush1.xpose.msra.mxu0 0.0
    %843 = vmatprep.subr.mxu0 0.0
    %844 = vmatpush1.xpose.msra.mxu0 0.0
    %845 = vmatprep.subr.mxu0 0.0
    %846 = vmatpush1.xpose.msra.mxu0 0.0
    %847 = vmatprep.subr.mxu0 0.0
    %848 = vmatpush1.xpose.msra.mxu0 0.0
    %849 = vmatprep.subr.mxu0 0.0
    %850 = vmatpush1.xpose.msra.mxu0 0.0
    %851 = vmatprep.subr.mxu0 0.0
    %852 = vmatpush1.xpose.msra.mxu0 0.0
    %853 = vmatprep.subr.mxu0 0.0
    %854 = vmatpush1.xpose.msra.mxu0 0.0
    %855 = vmatprep.subr.mxu0 0.0
    %856 = vmatpush1.xpose.msra.mxu0 0.0
    %857 = vmatprep.subr.mxu0 0.0
    %858 = vmatpush1.xpose.msra.mxu0 0.0
    %859 = vmatprep.subr.mxu0 0.0
    %860 = vmatpush1.xpose.msra.mxu0 0.0
    %861 = vmatprep.subr.mxu0 0.0
    %862 = vmatpush1.xpose.msra.mxu0 0.0
    %863 = vmatprep.subr.mxu0 0.0
    %864 = vmatpush1.xpose.msra.mxu0 0.0
    %865 = vmatprep.subr.mxu0 0.0
    %866 = vmatpush1.xpose.msra.mxu0 0.0
    %867 = vmatprep.subr.mxu0 0.0
    %868 = vmatpush1.xpose.msra.mxu0 0.0
    %869 = vmatprep.subr.mxu0 0.0
    %870 = vmatpush1.xpose.msra.mxu0 0.0
    %871 = vmatprep.subr.mxu0 0.0
    %872 = vmatpush1.xpose.msra.mxu0 0.0
    %873 = vmatprep.subr.mxu0 0.0
    %874 = vmatpush1.xpose.msra.mxu0 0.0
    %875 = vmatprep.mubr.f32.mxu0 0.0
    %876 = vmatmul.mubr.f32.gmra.mrb[0].mxu0 %v807
    %v877 = vpop.f32.mrb[0].mxu0
    %v878 = vadd.f32 0.0, %v877
    %v879 = vpop.f32.mrb[0].mxu0
    %880 = vdwg.mxu0
    %v881 = vsel %vm544, %v878, -inf
    %882 = vmax.xlane.f32.xlu0 %v881
    %v883 = vpop.xlane.xlu0 %882
    %v884 = vsub.f32 %v878, %v883
    %v885 = vmul.f32 %v884, 1.442695
    %v886 = vpow.pop %v885
    %v887 = vsel %vm544, %v886, 0.0
    %888 = vadd.xlane.f32.xlu0 %v887
    %v889 = vpop.xlane.xlu0 %888
    %v890 = vrcp.pop %v889
    %v891 = vmul.f32 %v886, %v890
    %892 = vrot.lane.b32.xlu0 %v407, 96
    %v893 = vpop.permute.xlu0 %892
    %v896 = vsel %vm544, %v891, 0
    %898 = vmatprep.subr.mxu0 0.0
    %899 = vmatpush1.msra.mxu0 %v893
    %900 = vmatprep.subr.mxu0 0.0
    %901 = vmatpush1.msra.mxu0 0.0
    %902 = vmatprep.subr.mxu0 0.0
    %903 = vmatpush1.msra.mxu0 0.0
    %904 = vmatprep.subr.mxu0 0.0
    %905 = vmatpush1.msra.mxu0 0.0
    %906 = vmatprep.subr.mxu0 0.0
    %907 = vmatpush1.msra.mxu0 0.0
    %908 = vmatprep.subr.mxu0 0.0
    %909 = vmatpush1.msra.mxu0 0.0
    %910 = vmatprep.subr.mxu0 0.0
    %911 = vmatpush1.msra.mxu0 0.0
    %912 = vmatprep.subr.mxu0 0.0
    %913 = vmatpush1.msra.mxu0 0.0
    %914 = vmatprep.subr.mxu0 0.0
    %915 = vmatpush1.msra.mxu0 0.0
    %916 = vmatprep.subr.mxu0 0.0
    %917 = vmatpush1.msra.mxu0 0.0
    %918 = vmatprep.subr.mxu0 0.0
    %919 = vmatpush1.msra.mxu0 0.0
    %920 = vmatprep.subr.mxu0 0.0
    %921 = vmatpush1.msra.mxu0 0.0
    %922 = vmatprep.subr.mxu0 0.0
    %923 = vmatpush1.msra.mxu0 0.0
    %924 = vmatprep.subr.mxu0 0.0
    %925 = vmatpush1.msra.mxu0 0.0
    %926 = vmatprep.subr.mxu0 0.0
    %927 = vmatpush1.msra.mxu0 0.0
    %928 = vmatprep.subr.mxu0 0.0
    %929 = vmatpush1.msra.mxu0 0.0
    %930 = vmatprep.subr.mxu0 0.0
    %931 = vmatpush1.msra.mxu0 0.0
    %932 = vmatprep.subr.mxu0 0.0
    %933 = vmatpush1.msra.mxu0 0.0
    %934 = vmatprep.subr.mxu0 0.0
    %935 = vmatpush1.msra.mxu0 0.0
    %936 = vmatprep.subr.mxu0 0.0
    %937 = vmatpush1.msra.mxu0 0.0
    %938 = vmatprep.subr.mxu0 0.0
    %939 = vmatpush1.msra.mxu0 0.0
    %940 = vmatprep.subr.mxu0 0.0
    %941 = vmatpush1.msra.mxu0 0.0
    %942 = vmatprep.subr.mxu0 0.0
    %943 = vmatpush1.msra.mxu0 0.0
    %944 = vmatprep.subr.mxu0 0.0
    %945 = vmatpush1.msra.mxu0 0.0
    %946 = vmatprep.subr.mxu0 0.0
    %947 = vmatpush1.msra.mxu0 0.0
    %948 = vmatprep.subr.mxu0 0.0
    %949 = vmatpush1.msra.mxu0 0.0
    %950 = vmatprep.subr.mxu0 0.0
    %951 = vmatpush1.msra.mxu0 0.0
    %952 = vmatprep.subr.mxu0 0.0
    %953 = vmatpush1.msra.mxu0 0.0
    %954 = vmatprep.subr.mxu0 0.0
    %955 = vmatpush1.msra.mxu0 0.0
    %956 = vmatprep.subr.mxu0 0.0
    %957 = vmatpush1.msra.mxu0 0.0
    %958 = vmatprep.subr.mxu0 0.0
    %959 = vmatpush1.msra.mxu0 0.0
    %960 = vmatprep.subr.mxu0 0.0
    %961 = vmatpush1.msra.mxu0 0.0
    %962 = vmatprep.mubr.f32.mxu0 0.0
    %963 = vmatmul.mubr.f32.gmra.mrb[0].mxu0 %v896
    %v964 = vpop.f32.mrb[0].mxu0
    %v965 = vadd.f32 0.0, %v964
    %v966 = vpop.f32.mrb[0].mxu0
    %967 = vdwg.mxu0
    %969 = vrot.lane.b32.xlu0 %v965, 32
    %v970 = vpop.permute.xlu0 %969
    %vm972 = vcmask 392448
    %973 = vst.msk [vmem:[#allocation2] sm:$0xff] %vm972, %v970
    %974 = vrot.lane.b32.xlu0 %v448, 32
    %v975 = vpop.permute.xlu0 %974
    %976 = vrot.lane.b32.xlu0 %v466, 32
    %v977 = vpop.permute.xlu0 %976
    %v978 = vsel %vm173, %v975, 0
    %v980 = vsel %vm173, %v977, 0
    %982 = vmatprep.subr.mxu0 0.0
    %983 = vmatpush1.xpose.msra.mxu0 %v980
    %984 = vmatprep.subr.mxu0 0.0
    %985 = vmatpush1.xpose.msra.mxu0 0.0
    %986 = vmatprep.subr.mxu0 0.0
    %987 = vmatpush1.xpose.msra.mxu0 0.0
    %988 = vmatprep.subr.mxu0 0.0
    %989 = vmatpush1.xpose.msra.mxu0 0.0
    %990 = vmatprep.subr.mxu0 0.0
    %991 = vmatpush1.xpose.msra.mxu0 0.0
    %992 = vmatprep.subr.mxu0 0.0
    %993 = vmatpush1.xpose.msra.mxu0 0.0
    %994 = vmatprep.subr.mxu0 0.0
    %995 = vmatpush1.xpose.msra.mxu0 0.0
    %996 = vmatprep.subr.mxu0 0.0
    %997 = vmatpush1.xpose.msra.mxu0 0.0
    %998 = vmatprep.subr.mxu0 0.0
    %999 = vmatpush1.xpose.msra.mxu0 0.0
    %1000 = vmatprep.subr.mxu0 0.0
    %1001 = vmatpush1.xpose.msra.mxu0 0.0
    %1002 = vmatprep.subr.mxu0 0.0
    %1003 = vmatpush1.xpose.msra.mxu0 0.0
    %1004 = vmatprep.subr.mxu0 0.0
    %1005 = vmatpush1.xpose.msra.mxu0 0.0
    %1006 = vmatprep.subr.mxu0 0.0
    %1007 = vmatpush1.xpose.msra.mxu0 0.0
    %1008 = vmatprep.subr.mxu0 0.0
    %1009 = vmatpush1.xpose.msra.mxu0 0.0
    %1010 = vmatprep.subr.mxu0 0.0
    %1011 = vmatpush1.xpose.msra.mxu0 0.0
    %1012 = vmatprep.subr.mxu0 0.0
    %1013 = vmatpush1.xpose.msra.mxu0 0.0
    %1014 = vmatprep.subr.mxu0 0.0
    %1015 = vmatpush1.xpose.msra.mxu0 0.0
    %1016 = vmatprep.subr.mxu0 0.0
    %1017 = vmatpush1.xpose.msra.mxu0 0.0
    %1018 = vmatprep.subr.mxu0 0.0
    %1019 = vmatpush1.xpose.msra.mxu0 0.0
    %1020 = vmatprep.subr.mxu0 0.0
    %1021 = vmatpush1.xpose.msra.mxu0 0.0
    %1022 = vmatprep.subr.mxu0 0.0
    %1023 = vmatpush1.xpose.msra.mxu0 0.0
    %1024 = vmatprep.subr.mxu0 0.0
    %1025 = vmatpush1.xpose.msra.mxu0 0.0
    %1026 = vmatprep.subr.mxu0 0.0
    %1027 = vmatpush1.xpose.msra.mxu0 0.0
    %1028 = vmatprep.subr.mxu0 0.0
    %1029 = vmatpush1.xpose.msra.mxu0 0.0
    %1030 = vmatprep.subr.mxu0 0.0
    %1031 = vmatpush1.xpose.msra.mxu0 0.0
    %1032 = vmatprep.subr.mxu0 0.0
    %1033 = vmatpush1.xpose.msra.mxu0 0.0
    %1034 = vmatprep.subr.mxu0 0.0
    %1035 = vmatpush1.xpose.msra.mxu0 0.0
    %1036 = vmatprep.subr.mxu0 0.0
    %1037 = vmatpush1.xpose.msra.mxu0 0.0
    %1038 = vmatprep.subr.mxu0 0.0
    %1039 = vmatpush1.xpose.msra.mxu0 0.0
    %1040 = vmatprep.subr.mxu0 0.0
    %1041 = vmatpush1.xpose.msra.mxu0 0.0
    %1042 = vmatprep.subr.mxu0 0.0
    %1043 = vmatpush1.xpose.msra.mxu0 0.0
    %1044 = vmatprep.subr.mxu0 0.0
    %1045 = vmatpush1.xpose.msra.mxu0 0.0
    %1046 = vmatprep.mubr.f32.mxu0 0.0
    %1047 = vmatmul.mubr.f32.gmra.mrb[0].mxu0 %v978
    %v1048 = vpop.f32.mrb[0].mxu0
    %v1049 = vadd.f32 0.0, %v1048
    %v1050 = vpop.f32.mrb[0].mxu0
    %1051 = vdwg.mxu0
    %v1052 = vsel %vm544, %v1049, -inf
    %1053 = vmax.xlane.f32.xlu0 %v1052
    %v1054 = vpop.xlane.xlu0 %1053
    %v1055 = vsub.f32 %v1049, %v1054
    %v1056 = vmul.f32 %v1055, 1.442695
    %v1057 = vpow.pop %v1056
    %v1058 = vsel %vm544, %v1057, 0.0
    %1059 = vadd.xlane.f32.xlu0 %v1058
    %v1060 = vpop.xlane.xlu0 %1059
    %v1061 = vrcp.pop %v1060
    %v1062 = vmul.f32 %v1057, %v1061
    %1063 = vrot.lane.b32.xlu0 %v407, 80
    %v1064 = vpop.permute.xlu0 %1063
    %v1067 = vsel %vm544, %v1062, 0
    %1069 = vmatprep.subr.mxu0 0.0
    %1070 = vmatpush1.msra.mxu0 %v1064
    %1071 = vmatprep.subr.mxu0 0.0
    %1072 = vmatpush1.msra.mxu0 0.0
    %1073 = vmatprep.subr.mxu0 0.0
    %1074 = vmatpush1.msra.mxu0 0.0
    %1075 = vmatprep.subr.mxu0 0.0
    %1076 = vmatpush1.msra.mxu0 0.0
    %1077 = vmatprep.subr.mxu0 0.0
    %1078 = vmatpush1.msra.mxu0 0.0
    %1079 = vmatprep.subr.mxu0 0.0
    %1080 = vmatpush1.msra.mxu0 0.0
    %1081 = vmatprep.subr.mxu0 0.0
    %1082 = vmatpush1.msra.mxu0 0.0
    %1083 = vmatprep.subr.mxu0 0.0
    %1084 = vmatpush1.msra.mxu0 0.0
    %1085 = vmatprep.subr.mxu0 0.0
    %1086 = vmatpush1.msra.mxu0 0.0
    %1087 = vmatprep.subr.mxu0 0.0
    %1088 = vmatpush1.msra.mxu0 0.0
    %1089 = vmatprep.subr.mxu0 0.0
    %1090 = vmatpush1.msra.mxu0 0.0
    %1091 = vmatprep.subr.mxu0 0.0
    %1092 = vmatpush1.msra.mxu0 0.0
    %1093 = vmatprep.subr.mxu0 0.0
    %1094 = vmatpush1.msra.mxu0 0.0
    %1095 = vmatprep.subr.mxu0 0.0
    %1096 = vmatpush1.msra.mxu0 0.0
    %1097 = vmatprep.subr.mxu0 0.0
    %1098 = vmatpush1.msra.mxu0 0.0
    %1099 = vmatprep.subr.mxu0 0.0
    %1100 = vmatpush1.msra.mxu0 0.0
    %1101 = vmatprep.subr.mxu0 0.0
    %1102 = vmatpush1.msra.mxu0 0.0
    %1103 = vmatprep.subr.mxu0 0.0
    %1104 = vmatpush1.msra.mxu0 0.0
    %1105 = vmatprep.subr.mxu0 0.0
    %1106 = vmatpush1.msra.mxu0 0.0
    %1107 = vmatprep.subr.mxu0 0.0
    %1108 = vmatpush1.msra.mxu0 0.0
    %1109 = vmatprep.subr.mxu0 0.0
    %1110 = vmatpush1.msra.mxu0 0.0
    %1111 = vmatprep.subr.mxu0 0.0
    %1112 = vmatpush1.msra.mxu0 0.0
    %1113 = vmatprep.subr.mxu0 0.0
    %1114 = vmatpush1.msra.mxu0 0.0
    %1115 = vmatprep.subr.mxu0 0.0
    %1116 = vmatpush1.msra.mxu0 0.0
    %1117 = vmatprep.subr.mxu0 0.0
    %1118 = vmatpush1.msra.mxu0 0.0
    %1119 = vmatprep.subr.mxu0 0.0
    %1120 = vmatpush1.msra.mxu0 0.0
    %1121 = vmatprep.subr.mxu0 0.0
    %1122 = vmatpush1.msra.mxu0 0.0
    %1123 = vmatprep.subr.mxu0 0.0
    %1124 = vmatpush1.msra.mxu0 0.0
    %1125 = vmatprep.subr.mxu0 0.0
    %1126 = vmatpush1.msra.mxu0 0.0
    %1127 = vmatprep.subr.mxu0 0.0
    %1128 = vmatpush1.msra.mxu0 0.0
    %1129 = vmatprep.subr.mxu0 0.0
    %1130 = vmatpush1.msra.mxu0 0.0
    %1131 = vmatprep.subr.mxu0 0.0
    %1132 = vmatpush1.msra.mxu0 0.0
    %1133 = vmatprep.mubr.f32.mxu0 0.0
    %1134 = vmatmul.mubr.f32.gmra.mrb[0].mxu0 %v1067
    %v1135 = vpop.f32.mrb[0].mxu0
    %v1136 = vadd.f32 0.0, %v1135
    %v1137 = vpop.f32.mrb[0].mxu0
    %1138 = vdwg.mxu0
    %1140 = vrot.lane.b32.xlu0 %v1136, 48
    %v1141 = vpop.permute.xlu0 %1140
    %vm1143 = vcmask 523648
    %1144 = vst.msk [vmem:[#allocation2] sm:$0xff] %vm1143, %v1141
    %v1146 = vsel %vm173, %v449, 0
    %v1149 = vsel %vm173, %v467, 0
    %1151 = vmatprep.subr.mxu0 0.0
    %1152 = vmatpush1.xpose.msra.mxu0 %v1149
    %1153 = vmatprep.subr.mxu0 0.0
    %1154 = vmatpush1.xpose.msra.mxu0 0.0
    %1155 = vmatprep.subr.mxu0 0.0
    %1156 = vmatpush1.xpose.msra.mxu0 0.0
    %1157 = vmatprep.subr.mxu0 0.0
    %1158 = vmatpush1.xpose.msra.mxu0 0.0
    %1159 = vmatprep.subr.mxu0 0.0
    %1160 = vmatpush1.xpose.msra.mxu0 0.0
    %1161 = vmatprep.subr.mxu0 0.0
    %1162 = vmatpush1.xpose.msra.mxu0 0.0
    %1163 = vmatprep.subr.mxu0 0.0
    %1164 = vmatpush1.xpose.msra.mxu0 0.0
    %1165 = vmatprep.subr.mxu0 0.0
    %1166 = vmatpush1.xpose.msra.mxu0 0.0
    %1167 = vmatprep.subr.mxu0 0.0
    %1168 = vmatpush1.xpose.msra.mxu0 0.0
    %1169 = vmatprep.subr.mxu0 0.0
    %1170 = vmatpush1.xpose.msra.mxu0 0.0
    %1171 = vmatprep.subr.mxu0 0.0
    %1172 = vmatpush1.xpose.msra.mxu0 0.0
    %1173 = vmatprep.subr.mxu0 0.0
    %1174 = vmatpush1.xpose.msra.mxu0 0.0
    %1175 = vmatprep.subr.mxu0 0.0
    %1176 = vmatpush1.xpose.msra.mxu0 0.0
    %1177 = vmatprep.subr.mxu0 0.0
    %1178 = vmatpush1.xpose.msra.mxu0 0.0
    %1179 = vmatprep.subr.mxu0 0.0
    %1180 = vmatpush1.xpose.msra.mxu0 0.0
    %1181 = vmatprep.subr.mxu0 0.0
    %1182 = vmatpush1.xpose.msra.mxu0 0.0
    %1183 = vmatprep.subr.mxu0 0.0
    %1184 = vmatpush1.xpose.msra.mxu0 0.0
    %1185 = vmatprep.subr.mxu0 0.0
    %1186 = vmatpush1.xpose.msra.mxu0 0.0
    %1187 = vmatprep.subr.mxu0 0.0
    %1188 = vmatpush1.xpose.msra.mxu0 0.0
    %1189 = vmatprep.subr.mxu0 0.0
    %1190 = vmatpush1.xpose.msra.mxu0 0.0
    %1191 = vmatprep.subr.mxu0 0.0
    %1192 = vmatpush1.xpose.msra.mxu0 0.0
    %1193 = vmatprep.subr.mxu0 0.0
    %1194 = vmatpush1.xpose.msra.mxu0 0.0
    %1195 = vmatprep.subr.mxu0 0.0
    %1196 = vmatpush1.xpose.msra.mxu0 0.0
    %1197 = vmatprep.subr.mxu0 0.0
    %1198 = vmatpush1.xpose.msra.mxu0 0.0
    %1199 = vmatprep.subr.mxu0 0.0
    %1200 = vmatpush1.xpose.msra.mxu0 0.0
    %1201 = vmatprep.subr.mxu0 0.0
    %1202 = vmatpush1.xpose.msra.mxu0 0.0
    %1203 = vmatprep.subr.mxu0 0.0
    %1204 = vmatpush1.xpose.msra.mxu0 0.0
    %1205 = vmatprep.subr.mxu0 0.0
    %1206 = vmatpush1.xpose.msra.mxu0 0.0
    %1207 = vmatprep.subr.mxu0 0.0
    %1208 = vmatpush1.xpose.msra.mxu0 0.0
    %1209 = vmatprep.subr.mxu0 0.0
    %1210 = vmatpush1.xpose.msra.mxu0 0.0
    %1211 = vmatprep.subr.mxu0 0.0
    %1212 = vmatpush1.xpose.msra.mxu0 0.0
    %1213 = vmatprep.subr.mxu0 0.0
    %1214 = vmatpush1.xpose.msra.mxu0 0.0
    %1215 = vmatprep.mubr.f32.mxu0 0.0
    %1216 = vmatmul.mubr.f32.gmra.mrb[0].mxu0 %v1146
    %v1217 = vpop.f32.mrb[0].mxu0
    %v1218 = vadd.f32 0.0, %v1217
    %v1219 = vpop.f32.mrb[0].mxu0
    %1220 = vdwg.mxu0
    %v1221 = vsel %vm544, %v1218, -inf
    %1222 = vmax.xlane.f32.xlu0 %v1221
    %v1223 = vpop.xlane.xlu0 %1222
    %v1224 = vsub.f32 %v1218, %v1223
    %v1225 = vmul.f32 %v1224, 1.442695
    %v1226 = vpow.pop %v1225
    %v1227 = vsel %vm544, %v1226, 0.0
    %1228 = vadd.xlane.f32.xlu0 %v1227
    %v1229 = vpop.xlane.xlu0 %1228
    %v1230 = vrcp.pop %v1229
    %v1231 = vmul.f32 %v1226, %v1230
    %v1233 = vsel %vm544, %v1231, 0
    %1235 = vmatprep.subr.mxu0 0.0
    %1236 = vmatpush1.msra.mxu0 %v412
    %1237 = vmatprep.subr.mxu0 0.0
    %1238 = vmatpush1.msra.mxu0 0.0
    %1239 = vmatprep.subr.mxu0 0.0
    %1240 = vmatpush1.msra.mxu0 0.0
    %1241 = vmatprep.subr.mxu0 0.0
    %1242 = vmatpush1.msra.mxu0 0.0
    %1243 = vmatprep.subr.mxu0 0.0
    %1244 = vmatpush1.msra.mxu0 0.0
    %1245 = vmatprep.subr.mxu0 0.0
    %1246 = vmatpush1.msra.mxu0 0.0
    %1247 = vmatprep.subr.mxu0 0.0
    %1248 = vmatpush1.msra.mxu0 0.0
    %1249 = vmatprep.subr.mxu0 0.0
    %1250 = vmatpush1.msra.mxu0 0.0
    %1251 = vmatprep.subr.mxu0 0.0
    %1252 = vmatpush1.msra.mxu0 0.0
    %1253 = vmatprep.subr.mxu0 0.0
    %1254 = vmatpush1.msra.mxu0 0.0
    %1255 = vmatprep.subr.mxu0 0.0
    %1256 = vmatpush1.msra.mxu0 0.0
    %1257 = vmatprep.subr.mxu0 0.0
    %1258 = vmatpush1.msra.mxu0 0.0
    %1259 = vmatprep.subr.mxu0 0.0
    %1260 = vmatpush1.msra.mxu0 0.0
    %1261 = vmatprep.subr.mxu0 0.0
    %1262 = vmatpush1.msra.mxu0 0.0
    %1263 = vmatprep.subr.mxu0 0.0
    %1264 = vmatpush1.msra.mxu0 0.0
    %1265 = vmatprep.subr.mxu0 0.0
    %1266 = vmatpush1.msra.mxu0 0.0
    %1267 = vmatprep.subr.mxu0 0.0
    %1268 = vmatpush1.msra.mxu0 0.0
    %1269 = vmatprep.subr.mxu0 0.0
    %1270 = vmatpush1.msra.mxu0 0.0
    %1271 = vmatprep.subr.mxu0 0.0
    %1272 = vmatpush1.msra.mxu0 0.0
    %1273 = vmatprep.subr.mxu0 0.0
    %1274 = vmatpush1.msra.mxu0 0.0
    %1275 = vmatprep.subr.mxu0 0.0
    %1276 = vmatpush1.msra.mxu0 0.0
    %1277 = vmatprep.subr.mxu0 0.0
    %1278 = vmatpush1.msra.mxu0 0.0
    %1279 = vmatprep.subr.mxu0 0.0
    %1280 = vmatpush1.msra.mxu0 0.0
    %1281 = vmatprep.subr.mxu0 0.0
    %1282 = vmatpush1.msra.mxu0 0.0
    %1283 = vmatprep.subr.mxu0 0.0
    %1284 = vmatpush1.msra.mxu0 0.0
    %1285 = vmatprep.subr.mxu0 0.0
    %1286 = vmatpush1.msra.mxu0 0.0
    %1287 = vmatprep.subr.mxu0 0.0
    %1288 = vmatpush1.msra.mxu0 0.0
    %1289 = vmatprep.subr.mxu0 0.0
    %1290 = vmatpush1.msra.mxu0 0.0
    %1291 = vmatprep.subr.mxu0 0.0
    %1292 = vmatpush1.msra.mxu0 0.0
    %1293 = vmatprep.subr.mxu0 0.0
    %1294 = vmatpush1.msra.mxu0 0.0
    %1295 = vmatprep.subr.mxu0 0.0
    %1296 = vmatpush1.msra.mxu0 0.0
    %1297 = vmatprep.subr.mxu0 0.0
    %1298 = vmatpush1.msra.mxu0 0.0
    %1299 = vmatprep.mubr.f32.mxu0 0.0
    %1300 = vmatmul.mubr.f32.gmra.mrb[0].mxu0 %v1233
    %v1301 = vpop.f32.mrb[0].mxu0
    %v1302 = vadd.f32 0.0, %v1301
    %v1303 = vpop.f32.mrb[0].mxu0
    %1304 = vdwg.mxu0
    %1305 = vst.msk [vmem:[#allocation2 + $0x8] sm:$0xff] %vm629, %v1302
    %1306 = vrot.lane.b32.xlu0 %v449, 96
    %v1307 = vpop.permute.xlu0 %1306
    %1308 = vrot.lane.b32.xlu0 %v467, 96
    %v1309 = vpop.permute.xlu0 %1308
    %v1310 = vsel %vm173, %v1307, 0
    %v1312 = vsel %vm173, %v1309, 0
    %1314 = vmatprep.subr.mxu0 0.0
    %1315 = vmatpush1.xpose.msra.mxu0 %v1312
    %1316 = vmatprep.subr.mxu0 0.0
    %1317 = vmatpush1.xpose.msra.mxu0 0.0
    %1318 = vmatprep.subr.mxu0 0.0
    %1319 = vmatpush1.xpose.msra.mxu0 0.0
    %1320 = vmatprep.subr.mxu0 0.0
    %1321 = vmatpush1.xpose.msra.mxu0 0.0
    %1322 = vmatprep.subr.mxu0 0.0
    %1323 = vmatpush1.xpose.msra.mxu0 0.0
    %1324 = vmatprep.subr.mxu0 0.0
    %1325 = vmatpush1.xpose.msra.mxu0 0.0
    %1326 = vmatprep.subr.mxu0 0.0
    %1327 = vmatpush1.xpose.msra.mxu0 0.0
    %1328 = vmatprep.subr.mxu0 0.0
    %1329 = vmatpush1.xpose.msra.mxu0 0.0
    %1330 = vmatprep.subr.mxu0 0.0
    %1331 = vmatpush1.xpose.msra.mxu0 0.0
    %1332 = vmatprep.subr.mxu0 0.0
    %1333 = vmatpush1.xpose.msra.mxu0 0.0
    %1334 = vmatprep.subr.mxu0 0.0
    %1335 = vmatpush1.xpose.msra.mxu0 0.0
    %1336 = vmatprep.subr.mxu0 0.0
    %1337 = vmatpush1.xpose.msra.mxu0 0.0
    %1338 = vmatprep.subr.mxu0 0.0
    %1339 = vmatpush1.xpose.msra.mxu0 0.0
    %1340 = vmatprep.subr.mxu0 0.0
    %1341 = vmatpush1.xpose.msra.mxu0 0.0
    %1342 = vmatprep.subr.mxu0 0.0
    %1343 = vmatpush1.xpose.msra.mxu0 0.0
    %1344 = vmatprep.subr.mxu0 0.0
    %1345 = vmatpush1.xpose.msra.mxu0 0.0
    %1346 = vmatprep.subr.mxu0 0.0
    %1347 = vmatpush1.xpose.msra.mxu0 0.0
    %1348 = vmatprep.subr.mxu0 0.0
    %1349 = vmatpush1.xpose.msra.mxu0 0.0
    %1350 = vmatprep.subr.mxu0 0.0
    %1351 = vmatpush1.xpose.msra.mxu0 0.0
    %1352 = vmatprep.subr.mxu0 0.0
    %1353 = vmatpush1.xpose.msra.mxu0 0.0
    %1354 = vmatprep.subr.mxu0 0.0
    %1355 = vmatpush1.xpose.msra.mxu0 0.0
    %1356 = vmatprep.subr.mxu0 0.0
    %1357 = vmatpush1.xpose.msra.mxu0 0.0
    %1358 = vmatprep.subr.mxu0 0.0
    %1359 = vmatpush1.xpose.msra.mxu0 0.0
    %1360 = vmatprep.subr.mxu0 0.0
    %1361 = vmatpush1.xpose.msra.mxu0 0.0
    %1362 = vmatprep.subr.mxu0 0.0
    %1363 = vmatpush1.xpose.msra.mxu0 0.0
    %1364 = vmatprep.subr.mxu0 0.0
    %1365 = vmatpush1.xpose.msra.mxu0 0.0
    %1366 = vmatprep.subr.mxu0 0.0
    %1367 = vmatpush1.xpose.msra.mxu0 0.0
    %1368 = vmatprep.subr.mxu0 0.0
    %1369 = vmatpush1.xpose.msra.mxu0 0.0
    %1370 = vmatprep.subr.mxu0 0.0
    %1371 = vmatpush1.xpose.msra.mxu0 0.0
    %1372 = vmatprep.subr.mxu0 0.0
    %1373 = vmatpush1.xpose.msra.mxu0 0.0
    %1374 = vmatprep.subr.mxu0 0.0
    %1375 = vmatpush1.xpose.msra.mxu0 0.0
    %1376 = vmatprep.subr.mxu0 0.0
    %1377 = vmatpush1.xpose.msra.mxu0 0.0
    %1378 = vmatprep.mubr.f32.mxu0 0.0
    %1379 = vmatmul.mubr.f32.gmra.mrb[0].mxu0 %v1310
    %v1380 = vpop.f32.mrb[0].mxu0
    %v1381 = vadd.f32 0.0, %v1380
    %v1382 = vpop.f32.mrb[0].mxu0
    %1383 = vdwg.mxu0
    %v1384 = vsel %vm544, %v1381, -inf
    %1385 = vmax.xlane.f32.xlu0 %v1384
    %v1386 = vpop.xlane.xlu0 %1385
    %v1387 = vsub.f32 %v1381, %v1386
    %v1388 = vmul.f32 %v1387, 1.442695
    %v1389 = vpow.pop %v1388
    %v1390 = vsel %vm544, %v1389, 0.0
    %1391 = vadd.xlane.f32.xlu0 %v1390
    %v1392 = vpop.xlane.xlu0 %1391
    %v1393 = vrcp.pop %v1392
    %v1394 = vmul.f32 %v1389, %v1393
    %1396 = vrot.lane.b32.xlu0 %v412, 112
    %v1397 = vpop.permute.xlu0 %1396
    %v1400 = vsel %vm544, %v1394, 0
    %1402 = vmatprep.subr.mxu0 0.0
    %1403 = vmatpush1.msra.mxu0 %v1397
    %1404 = vmatprep.subr.mxu0 0.0
    %1405 = vmatpush1.msra.mxu0 0.0
    %1406 = vmatprep.subr.mxu0 0.0
    %1407 = vmatpush1.msra.mxu0 0.0
    %1408 = vmatprep.subr.mxu0 0.0
    %1409 = vmatpush1.msra.mxu0 0.0
    %1410 = vmatprep.subr.mxu0 0.0
    %1411 = vmatpush1.msra.mxu0 0.0
    %1412 = vmatprep.subr.mxu0 0.0
    %1413 = vmatpush1.msra.mxu0 0.0
    %1414 = vmatprep.subr.mxu0 0.0
    %1415 = vmatpush1.msra.mxu0 0.0
    %1416 = vmatprep.subr.mxu0 0.0
    %1417 = vmatpush1.msra.mxu0 0.0
    %1418 = vmatprep.subr.mxu0 0.0
    %1419 = vmatpush1.msra.mxu0 0.0
    %1420 = vmatprep.subr.mxu0 0.0
    %1421 = vmatpush1.msra.mxu0 0.0
    %1422 = vmatprep.subr.mxu0 0.0
    %1423 = vmatpush1.msra.mxu0 0.0
    %1424 = vmatprep.subr.mxu0 0.0
    %1425 = vmatpush1.msra.mxu0 0.0
    %1426 = vmatprep.subr.mxu0 0.0
    %1427 = vmatpush1.msra.mxu0 0.0
    %1428 = vmatprep.subr.mxu0 0.0
    %1429 = vmatpush1.msra.mxu0 0.0
    %1430 = vmatprep.subr.mxu0 0.0
    %1431 = vmatpush1.msra.mxu0 0.0
    %1432 = vmatprep.subr.mxu0 0.0
    %1433 = vmatpush1.msra.mxu0 0.0
    %1434 = vmatprep.subr.mxu0 0.0
    %1435 = vmatpush1.msra.mxu0 0.0
    %1436 = vmatprep.subr.mxu0 0.0
    %1437 = vmatpush1.msra.mxu0 0.0
    %1438 = vmatprep.subr.mxu0 0.0
    %1439 = vmatpush1.msra.mxu0 0.0
    %1440 = vmatprep.subr.mxu0 0.0
    %1441 = vmatpush1.msra.mxu0 0.0
    %1442 = vmatprep.subr.mxu0 0.0
    %1443 = vmatpush1.msra.mxu0 0.0
    %1444 = vmatprep.subr.mxu0 0.0
    %1445 = vmatpush1.msra.mxu0 0.0
    %1446 = vmatprep.subr.mxu0 0.0
    %1447 = vmatpush1.msra.mxu0 0.0
    %1448 = vmatprep.subr.mxu0 0.0
    %1449 = vmatpush1.msra.mxu0 0.0
    %1450 = vmatprep.subr.mxu0 0.0
    %1451 = vmatpush1.msra.mxu0 0.0
    %1452 = vmatprep.subr.mxu0 0.0
    %1453 = vmatpush1.msra.mxu0 0.0
    %1454 = vmatprep.subr.mxu0 0.0
    %1455 = vmatpush1.msra.mxu0 0.0
    %1456 = vmatprep.subr.mxu0 0.0
    %1457 = vmatpush1.msra.mxu0 0.0
    %1458 = vmatprep.subr.mxu0 0.0
    %1459 = vmatpush1.msra.mxu0 0.0
    %1460 = vmatprep.subr.mxu0 0.0
    %1461 = vmatpush1.msra.mxu0 0.0
    %1462 = vmatprep.subr.mxu0 0.0
    %1463 = vmatpush1.msra.mxu0 0.0
    %1464 = vmatprep.subr.mxu0 0.0
    %1465 = vmatpush1.msra.mxu0 0.0
    %1466 = vmatprep.mubr.f32.mxu0 0.0
    %1467 = vmatmul.mubr.f32.gmra.mrb[0].mxu0 %v1400
    %v1468 = vpop.f32.mrb[0].mxu0
    %v1469 = vadd.f32 0.0, %v1468
    %v1470 = vpop.f32.mrb[0].mxu0
    %1471 = vdwg.mxu0
    %1473 = vrot.lane.b32.xlu0 %v1469, 16
    %v1474 = vpop.permute.xlu0 %1473
    %1476 = vst.msk [vmem:[#allocation2 + $0x8] sm:$0xff] %vm801, %v1474
    %1477 = vrot.lane.b32.xlu0 %v449, 64
    %v1478 = vpop.permute.xlu0 %1477
    %1479 = vrot.lane.b32.xlu0 %v467, 64
    %v1480 = vpop.permute.xlu0 %1479
    %v1481 = vsel %vm173, %v1478, 0
    %v1483 = vsel %vm173, %v1480, 0
    %1485 = vmatprep.subr.mxu0 0.0
    %1486 = vmatpush1.xpose.msra.mxu0 %v1483
    %1487 = vmatprep.subr.mxu0 0.0
    %1488 = vmatpush1.xpose.msra.mxu0 0.0
    %1489 = vmatprep.subr.mxu0 0.0
    %1490 = vmatpush1.xpose.msra.mxu0 0.0
    %1491 = vmatprep.subr.mxu0 0.0
    %1492 = vmatpush1.xpose.msra.mxu0 0.0
    %1493 = vmatprep.subr.mxu0 0.0
    %1494 = vmatpush1.xpose.msra.mxu0 0.0
    %1495 = vmatprep.subr.mxu0 0.0
    %1496 = vmatpush1.xpose.msra.mxu0 0.0
    %1497 = vmatprep.subr.mxu0 0.0
    %1498 = vmatpush1.xpose.msra.mxu0 0.0
    %1499 = vmatprep.subr.mxu0 0.0
    %1500 = vmatpush1.xpose.msra.mxu0 0.0
    %1501 = vmatprep.subr.mxu0 0.0
    %1502 = vmatpush1.xpose.msra.mxu0 0.0
    %1503 = vmatprep.subr.mxu0 0.0
    %1504 = vmatpush1.xpose.msra.mxu0 0.0
    %1505 = vmatprep.subr.mxu0 0.0
    %1506 = vmatpush1.xpose.msra.mxu0 0.0
    %1507 = vmatprep.subr.mxu0 0.0
    %1508 = vmatpush1.xpose.msra.mxu0 0.0
    %1509 = vmatprep.subr.mxu0 0.0
    %1510 = vmatpush1.xpose.msra.mxu0 0.0
    %1511 = vmatprep.subr.mxu0 0.0
    %1512 = vmatpush1.xpose.msra.mxu0 0.0
    %1513 = vmatprep.subr.mxu0 0.0
    %1514 = vmatpush1.xpose.msra.mxu0 0.0
    %1515 = vmatprep.subr.mxu0 0.0
    %1516 = vmatpush1.xpose.msra.mxu0 0.0
    %1517 = vmatprep.subr.mxu0 0.0
    %1518 = vmatpush1.xpose.msra.mxu0 0.0
    %1519 = vmatprep.subr.mxu0 0.0
    %1520 = vmatpush1.xpose.msra.mxu0 0.0
    %1521 = vmatprep.subr.mxu0 0.0
    %1522 = vmatpush1.xpose.msra.mxu0 0.0
    %1523 = vmatprep.subr.mxu0 0.0
    %1524 = vmatpush1.xpose.msra.mxu0 0.0
    %1525 = vmatprep.subr.mxu0 0.0
    %1526 = vmatpush1.xpose.msra.mxu0 0.0
    %1527 = vmatprep.subr.mxu0 0.0
    %1528 = vmatpush1.xpose.msra.mxu0 0.0
    %1529 = vmatprep.subr.mxu0 0.0
    %1530 = vmatpush1.xpose.msra.mxu0 0.0
    %1531 = vmatprep.subr.mxu0 0.0
    %1532 = vmatpush1.xpose.msra.mxu0 0.0
    %1533 = vmatprep.subr.mxu0 0.0
    %1534 = vmatpush1.xpose.msra.mxu0 0.0
    %1535 = vmatprep.subr.mxu0 0.0
    %1536 = vmatpush1.xpose.msra.mxu0 0.0
    %1537 = vmatprep.subr.mxu0 0.0
    %1538 = vmatpush1.xpose.msra.mxu0 0.0
    %1539 = vmatprep.subr.mxu0 0.0
    %1540 = vmatpush1.xpose.msra.mxu0 0.0
    %1541 = vmatprep.subr.mxu0 0.0
    %1542 = vmatpush1.xpose.msra.mxu0 0.0
    %1543 = vmatprep.subr.mxu0 0.0
    %1544 = vmatpush1.xpose.msra.mxu0 0.0
    %1545 = vmatprep.subr.mxu0 0.0
    %1546 = vmatpush1.xpose.msra.mxu0 0.0
    %1547 = vmatprep.subr.mxu0 0.0
    %1548 = vmatpush1.xpose.msra.mxu0 0.0
    %1549 = vmatprep.mubr.f32.mxu0 0.0
    %1550 = vmatmul.mubr.f32.gmra.mrb[0].mxu0 %v1481
    %v1551 = vpop.f32.mrb[0].mxu0
    %v1552 = vadd.f32 0.0, %v1551
    %v1553 = vpop.f32.mrb[0].mxu0
    %1554 = vdwg.mxu0
    %v1555 = vsel %vm544, %v1552, -inf
    %1556 = vmax.xlane.f32.xlu0 %v1555
    %v1557 = vpop.xlane.xlu0 %1556
    %v1558 = vsub.f32 %v1552, %v1557
    %v1559 = vmul.f32 %v1558, 1.442695
    %v1560 = vpow.pop %v1559
    %v1561 = vsel %vm544, %v1560, 0.0
    %1562 = vadd.xlane.f32.xlu0 %v1561
    %v1563 = vpop.xlane.xlu0 %1562
    %v1564 = vrcp.pop %v1563
    %v1565 = vmul.f32 %v1560, %v1564
    %1566 = vrot.lane.b32.xlu0 %v412, 96
    %v1567 = vpop.permute.xlu0 %1566
    %v1570 = vsel %vm544, %v1565, 0
    %1572 = vmatprep.subr.mxu0 0.0
    %1573 = vmatpush1.msra.mxu0 %v1567
    %1574 = vmatprep.subr.mxu0 0.0
    %1575 = vmatpush1.msra.mxu0 0.0
    %1576 = vmatprep.subr.mxu0 0.0
    %1577 = vmatpush1.msra.mxu0 0.0
    %1578 = vmatprep.subr.mxu0 0.0
    %1579 = vmatpush1.msra.mxu0 0.0
    %1580 = vmatprep.subr.mxu0 0.0
    %1581 = vmatpush1.msra.mxu0 0.0
    %1582 = vmatprep.subr.mxu0 0.0
    %1583 = vmatpush1.msra.mxu0 0.0
    %1584 = vmatprep.subr.mxu0 0.0
    %1585 = vmatpush1.msra.mxu0 0.0
    %1586 = vmatprep.subr.mxu0 0.0
    %1587 = vmatpush1.msra.mxu0 0.0
    %1588 = vmatprep.subr.mxu0 0.0
    %1589 = vmatpush1.msra.mxu0 0.0
    %1590 = vmatprep.subr.mxu0 0.0
    %1591 = vmatpush1.msra.mxu0 0.0
    %1592 = vmatprep.subr.mxu0 0.0
    %1593 = vmatpush1.msra.mxu0 0.0
    %1594 = vmatprep.subr.mxu0 0.0
    %1595 = vmatpush1.msra.mxu0 0.0
    %1596 = vmatprep.subr.mxu0 0.0
    %1597 = vmatpush1.msra.mxu0 0.0
    %1598 = vmatprep.subr.mxu0 0.0
    %1599 = vmatpush1.msra.mxu0 0.0
    %1600 = vmatprep.subr.mxu0 0.0
    %1601 = vmatpush1.msra.mxu0 0.0
    %1602 = vmatprep.subr.mxu0 0.0
    %1603 = vmatpush1.msra.mxu0 0.0
    %1604 = vmatprep.subr.mxu0 0.0
    %1605 = vmatpush1.msra.mxu0 0.0
    %1606 = vmatprep.subr.mxu0 0.0
    %1607 = vmatpush1.msra.mxu0 0.0
    %1608 = vmatprep.subr.mxu0 0.0
    %1609 = vmatpush1.msra.mxu0 0.0
    %1610 = vmatprep.subr.mxu0 0.0
    %1611 = vmatpush1.msra.mxu0 0.0
    %1612 = vmatprep.subr.mxu0 0.0
    %1613 = vmatpush1.msra.mxu0 0.0
    %1614 = vmatprep.subr.mxu0 0.0
    %1615 = vmatpush1.msra.mxu0 0.0
    %1616 = vmatprep.subr.mxu0 0.0
    %1617 = vmatpush1.msra.mxu0 0.0
    %1618 = vmatprep.subr.mxu0 0.0
    %1619 = vmatpush1.msra.mxu0 0.0
    %1620 = vmatprep.subr.mxu0 0.0
    %1621 = vmatpush1.msra.mxu0 0.0
    %1622 = vmatprep.subr.mxu0 0.0
    %1623 = vmatpush1.msra.mxu0 0.0
    %1624 = vmatprep.subr.mxu0 0.0
    %1625 = vmatpush1.msra.mxu0 0.0
    %1626 = vmatprep.subr.mxu0 0.0
    %1627 = vmatpush1.msra.mxu0 0.0
    %1628 = vmatprep.subr.mxu0 0.0
    %1629 = vmatpush1.msra.mxu0 0.0
    %1630 = vmatprep.subr.mxu0 0.0
    %1631 = vmatpush1.msra.mxu0 0.0
    %1632 = vmatprep.subr.mxu0 0.0
    %1633 = vmatpush1.msra.mxu0 0.0
    %1634 = vmatprep.subr.mxu0 0.0
    %1635 = vmatpush1.msra.mxu0 0.0
    %1636 = vmatprep.mubr.f32.mxu0 0.0
    %1637 = vmatmul.mubr.f32.gmra.mrb[0].mxu0 %v1570
    %v1638 = vpop.f32.mrb[0].mxu0
    %v1639 = vadd.f32 0.0, %v1638
    %v1640 = vpop.f32.mrb[0].mxu0
    %1641 = vdwg.mxu0
    %1643 = vrot.lane.b32.xlu0 %v1639, 32
    %v1644 = vpop.permute.xlu0 %1643
    %1646 = vst.msk [vmem:[#allocation2 + $0x8] sm:$0xff] %vm972, %v1644
    %1647 = vrot.lane.b32.xlu0 %v449, 32
    %v1648 = vpop.permute.xlu0 %1647
    %1649 = vrot.lane.b32.xlu0 %v467, 32
    %v1650 = vpop.permute.xlu0 %1649
    %v1651 = vsel %vm173, %v1648, 0
    %v1653 = vsel %vm173, %v1650, 0
    %1655 = vmatprep.subr.mxu0 0.0
    %1656 = vmatpush1.xpose.msra.mxu0 %v1653
    %1657 = vmatprep.subr.mxu0 0.0
    %1658 = vmatpush1.xpose.msra.mxu0 0.0
    %1659 = vmatprep.subr.mxu0 0.0
    %1660 = vmatpush1.xpose.msra.mxu0 0.0
    %1661 = vmatprep.subr.mxu0 0.0
    %1662 = vmatpush1.xpose.msra.mxu0 0.0
    %1663 = vmatprep.subr.mxu0 0.0
    %1664 = vmatpush1.xpose.msra.mxu0 0.0
    %1665 = vmatprep.subr.mxu0 0.0
    %1666 = vmatpush1.xpose.msra.mxu0 0.0
    %1667 = vmatprep.subr.mxu0 0.0
    %1668 = vmatpush1.xpose.msra.mxu0 0.0
    %1669 = vmatprep.subr.mxu0 0.0
    %1670 = vmatpush1.xpose.msra.mxu0 0.0
    %1671 = vmatprep.subr.mxu0 0.0
    %1672 = vmatpush1.xpose.msra.mxu0 0.0
    %1673 = vmatprep.subr.mxu0 0.0
    %1674 = vmatpush1.xpose.msra.mxu0 0.0
    %1675 = vmatprep.subr.mxu0 0.0
    %1676 = vmatpush1.xpose.msra.mxu0 0.0
    %1677 = vmatprep.subr.mxu0 0.0
    %1678 = vmatpush1.xpose.msra.mxu0 0.0
    %1679 = vmatprep.subr.mxu0 0.0
    %1680 = vmatpush1.xpose.msra.mxu0 0.0
    %1681 = vmatprep.subr.mxu0 0.0
    %1682 = vmatpush1.xpose.msra.mxu0 0.0
    %1683 = vmatprep.subr.mxu0 0.0
    %1684 = vmatpush1.xpose.msra.mxu0 0.0
    %1685 = vmatprep.subr.mxu0 0.0
    %1686 = vmatpush1.xpose.msra.mxu0 0.0
    %1687 = vmatprep.subr.mxu0 0.0
    %1688 = vmatpush1.xpose.msra.mxu0 0.0
    %1689 = vmatprep.subr.mxu0 0.0
    %1690 = vmatpush1.xpose.msra.mxu0 0.0
    %1691 = vmatprep.subr.mxu0 0.0
    %1692 = vmatpush1.xpose.msra.mxu0 0.0
    %1693 = vmatprep.subr.mxu0 0.0
    %1694 = vmatpush1.xpose.msra.mxu0 0.0
    %1695 = vmatprep.subr.mxu0 0.0
    %1696 = vmatpush1.xpose.msra.mxu0 0.0
    %1697 = vmatprep.subr.mxu0 0.0
    %1698 = vmatpush1.xpose.msra.mxu0 0.0
    %1699 = vmatprep.subr.mxu0 0.0
    %1700 = vmatpush1.xpose.msra.mxu0 0.0
    %1701 = vmatprep.subr.mxu0 0.0
    %1702 = vmatpush1.xpose.msra.mxu0 0.0
    %1703 = vmatprep.subr.mxu0 0.0
    %1704 = vmatpush1.xpose.msra.mxu0 0.0
    %1705 = vmatprep.subr.mxu0 0.0
    %1706 = vmatpush1.xpose.msra.mxu0 0.0
    %1707 = vmatprep.subr.mxu0 0.0
    %1708 = vmatpush1.xpose.msra.mxu0 0.0
    %1709 = vmatprep.subr.mxu0 0.0
    %1710 = vmatpush1.xpose.msra.mxu0 0.0
    %1711 = vmatprep.subr.mxu0 0.0
    %1712 = vmatpush1.xpose.msra.mxu0 0.0
    %1713 = vmatprep.subr.mxu0 0.0
    %1714 = vmatpush1.xpose.msra.mxu0 0.0
    %1715 = vmatprep.subr.mxu0 0.0
    %1716 = vmatpush1.xpose.msra.mxu0 0.0
    %1717 = vmatprep.subr.mxu0 0.0
    %1718 = vmatpush1.xpose.msra.mxu0 0.0
    %1719 = vmatprep.mubr.f32.mxu0 0.0
    %1720 = vmatmul.mubr.f32.gmra.mrb[0].mxu0 %v1651
    %v1721 = vpop.f32.mrb[0].mxu0
    %v1722 = vadd.f32 0.0, %v1721
    %v1723 = vpop.f32.mrb[0].mxu0
    %1724 = vdwg.mxu0
    %v1725 = vsel %vm544, %v1722, -inf
    %1726 = vmax.xlane.f32.xlu0 %v1725
    %v1727 = vpop.xlane.xlu0 %1726
    %v1728 = vsub.f32 %v1722, %v1727
    %v1729 = vmul.f32 %v1728, 1.442695
    %v1730 = vpow.pop %v1729
    %v1731 = vsel %vm544, %v1730, 0.0
    %1732 = vadd.xlane.f32.xlu0 %v1731
    %v1733 = vpop.xlane.xlu0 %1732
    %v1734 = vrcp.pop %v1733
    %v1735 = vmul.f32 %v1730, %v1734
    %1736 = vrot.lane.b32.xlu0 %v412, 80
    %v1737 = vpop.permute.xlu0 %1736
    %v1740 = vsel %vm544, %v1735, 0
    %1742 = vmatprep.subr.mxu0 0.0
    %1743 = vmatpush1.msra.mxu0 %v1737
    %1744 = vmatprep.subr.mxu0 0.0
    %1745 = vmatpush1.msra.mxu0 0.0
    %1746 = vmatprep.subr.mxu0 0.0
    %1747 = vmatpush1.msra.mxu0 0.0
    %1748 = vmatprep.subr.mxu0 0.0
    %1749 = vmatpush1.msra.mxu0 0.0
    %1750 = vmatprep.subr.mxu0 0.0
    %1751 = vmatpush1.msra.mxu0 0.0
    %1752 = vmatprep.subr.mxu0 0.0
    %1753 = vmatpush1.msra.mxu0 0.0
    %1754 = vmatprep.subr.mxu0 0.0
    %1755 = vmatpush1.msra.mxu0 0.0
    %1756 = vmatprep.subr.mxu0 0.0
    %1757 = vmatpush1.msra.mxu0 0.0
    %1758 = vmatprep.subr.mxu0 0.0
    %1759 = vmatpush1.msra.mxu0 0.0
    %1760 = vmatprep.subr.mxu0 0.0
    %1761 = vmatpush1.msra.mxu0 0.0
    %1762 = vmatprep.subr.mxu0 0.0
    %1763 = vmatpush1.msra.mxu0 0.0
    %1764 = vmatprep.subr.mxu0 0.0
    %1765 = vmatpush1.msra.mxu0 0.0
    %1766 = vmatprep.subr.mxu0 0.0
    %1767 = vmatpush1.msra.mxu0 0.0
    %1768 = vmatprep.subr.mxu0 0.0
    %1769 = vmatpush1.msra.mxu0 0.0
    %1770 = vmatprep.subr.mxu0 0.0
    %1771 = vmatpush1.msra.mxu0 0.0
    %1772 = vmatprep.subr.mxu0 0.0
    %1773 = vmatpush1.msra.mxu0 0.0
    %1774 = vmatprep.subr.mxu0 0.0
    %1775 = vmatpush1.msra.mxu0 0.0
    %1776 = vmatprep.subr.mxu0 0.0
    %1777 = vmatpush1.msra.mxu0 0.0
    %1778 = vmatprep.subr.mxu0 0.0
    %1779 = vmatpush1.msra.mxu0 0.0
    %1780 = vmatprep.subr.mxu0 0.0
    %1781 = vmatpush1.msra.mxu0 0.0
    %1782 = vmatprep.subr.mxu0 0.0
    %1783 = vmatpush1.msra.mxu0 0.0
    %1784 = vmatprep.subr.mxu0 0.0
    %1785 = vmatpush1.msra.mxu0 0.0
    %1786 = vmatprep.subr.mxu0 0.0
    %1787 = vmatpush1.msra.mxu0 0.0
    %1788 = vmatprep.subr.mxu0 0.0
    %1789 = vmatpush1.msra.mxu0 0.0
    %1790 = vmatprep.subr.mxu0 0.0
    %1791 = vmatpush1.msra.mxu0 0.0
    %1792 = vmatprep.subr.mxu0 0.0
    %1793 = vmatpush1.msra.mxu0 0.0
    %1794 = vmatprep.subr.mxu0 0.0
    %1795 = vmatpush1.msra.mxu0 0.0
    %1796 = vmatprep.subr.mxu0 0.0
    %1797 = vmatpush1.msra.mxu0 0.0
    %1798 = vmatprep.subr.mxu0 0.0
    %1799 = vmatpush1.msra.mxu0 0.0
    %1800 = vmatprep.subr.mxu0 0.0
    %1801 = vmatpush1.msra.mxu0 0.0
    %1802 = vmatprep.subr.mxu0 0.0
    %1803 = vmatpush1.msra.mxu0 0.0
    %1804 = vmatprep.subr.mxu0 0.0
    %1805 = vmatpush1.msra.mxu0 0.0
    %1806 = vmatprep.mubr.f32.mxu0 0.0
    %1807 = vmatmul.mubr.f32.gmra.mrb[0].mxu0 %v1740
    %v1808 = vpop.f32.mrb[0].mxu0
    %v1809 = vadd.f32 0.0, %v1808
    %v1810 = vpop.f32.mrb[0].mxu0
    %1811 = vdwg.mxu0
    %1813 = vrot.lane.b32.xlu0 %v1809, 48
    %v1814 = vpop.permute.xlu0 %1813
    %1816 = vst.msk [vmem:[#allocation2 + $0x8] sm:$0xff] %vm1143, %v1814
    %v1817 = vld [vmem:[#allocation2] sm:$0xff]
    %v1818 = vld [vmem:[#allocation2 + $0x8] sm:$0xff]
    %v1819 = vld [vmem:[#allocation9] sm:$0xff]
    %v1820 = vld [vmem:[#allocation9 + $0x8] sm:$0xff]
    %v1821 = vld [vmem:[#allocation9 + $0x10] sm:$0xff]
    %v1822 = vld [vmem:[#allocation9 + $0x18] sm:$0xff]
    %v1823 = vld [vmem:[#allocation9 + $0x20] sm:$0xff]
    %v1824 = vld [vmem:[#allocation9 + $0x28] sm:$0xff]
    %v1825 = vld [vmem:[#allocation9 + $0x30] sm:$0xff]
    %v1826 = vld [vmem:[#allocation9 + $0x38] sm:$0xff]
    %v1828 = vsel %vm89, %v1817, 0
    %v1831 = vsel %vm89, %v1818, 0
    %1833 = vmatprep.subr.mxu0 0.0
    %1834 = vmatpush1.msra.mxu0 %v1819
    %1835 = vmatprep.subr.mxu0 0.0
    %1836 = vmatpush1.msra.mxu0 %v1820
    %1837 = vmatprep.subr.mxu0 0.0
    %1838 = vmatpush1.msra.mxu0 %v1821
    %1839 = vmatprep.subr.mxu0 0.0
    %1840 = vmatpush1.msra.mxu0 %v1822
    %1841 = vmatprep.subr.mxu0 0.0
    %1842 = vmatpush1.msra.mxu0 %v1823
    %1843 = vmatprep.subr.mxu0 0.0
    %1844 = vmatpush1.msra.mxu0 %v1824
    %1845 = vmatprep.subr.mxu0 0.0
    %1846 = vmatpush1.msra.mxu0 %v1825
    %1847 = vmatprep.subr.mxu0 0.0
    %1848 = vmatpush1.msra.mxu0 %v1826
    %1849 = vmatprep.subr.mxu0 0.0
    %1850 = vmatpush1.msra.mxu0 0.0
    %1851 = vmatprep.subr.mxu0 0.0
    %1852 = vmatpush1.msra.mxu0 0.0
    %1853 = vmatprep.subr.mxu0 0.0
    %1854 = vmatpush1.msra.mxu0 0.0
    %1855 = vmatprep.subr.mxu0 0.0
    %1856 = vmatpush1.msra.mxu0 0.0
    %1857 = vmatprep.subr.mxu0 0.0
    %1858 = vmatpush1.msra.mxu0 0.0
    %1859 = vmatprep.subr.mxu0 0.0
    %1860 = vmatpush1.msra.mxu0 0.0
    %1861 = vmatprep.subr.mxu0 0.0
    %1862 = vmatpush1.msra.mxu0 0.0
    %1863 = vmatprep.subr.mxu0 0.0
    %1864 = vmatpush1.msra.mxu0 0.0
    %1865 = vmatprep.subr.mxu0 0.0
    %1866 = vmatpush1.msra.mxu0 0.0
    %1867 = vmatprep.subr.mxu0 0.0
    %1868 = vmatpush1.msra.mxu0 0.0
    %1869 = vmatprep.subr.mxu0 0.0
    %1870 = vmatpush1.msra.mxu0 0.0
    %1871 = vmatprep.subr.mxu0 0.0
    %1872 = vmatpush1.msra.mxu0 0.0
    %1873 = vmatprep.subr.mxu0 0.0
    %1874 = vmatpush1.msra.mxu0 0.0
    %1875 = vmatprep.subr.mxu0 0.0
    %1876 = vmatpush1.msra.mxu0 0.0
    %1877 = vmatprep.subr.mxu0 0.0
    %1878 = vmatpush1.msra.mxu0 0.0
    %1879 = vmatprep.subr.mxu0 0.0
    %1880 = vmatpush1.msra.mxu0 0.0
    %1881 = vmatprep.subr.mxu0 0.0
    %1882 = vmatpush1.msra.mxu0 0.0
    %1883 = vmatprep.subr.mxu0 0.0
    %1884 = vmatpush1.msra.mxu0 0.0
    %1885 = vmatprep.subr.mxu0 0.0
    %1886 = vmatpush1.msra.mxu0 0.0
    %1887 = vmatprep.subr.mxu0 0.0
    %1888 = vmatpush1.msra.mxu0 0.0
    %1889 = vmatprep.subr.mxu0 0.0
    %1890 = vmatpush1.msra.mxu0 0.0
    %1891 = vmatprep.subr.mxu0 0.0
    %1892 = vmatpush1.msra.mxu0 0.0
    %1893 = vmatprep.subr.mxu0 0.0
    %1894 = vmatpush1.msra.mxu0 0.0
    %1895 = vmatprep.subr.mxu0 0.0
    %1896 = vmatpush1.msra.mxu0 0.0
    %1897 = vmatprep.mubr.f32.mxu0 0.0
    %1898 = vmatmul.mubr.f32.gmra.mrb[0].mxu0 %v1828
    %v1899 = vpop.f32.mrb[0].mxu0
    %v1900 = vadd.f32 0.0, %v1899
    %v1901 = vpop.f32.mrb[0].mxu0
    %1902 = vmatprep.mubr.f32.mxu0 0.0
    %1903 = vmatmul.mubr.f32.gmra.mrb[0].mxu0 %v1831
    %v1904 = vpop.f32.mrb[0].mxu0
    %v1905 = vadd.f32 0.0, %v1904
    %v1906 = vpop.f32.mrb[0].mxu0
    %1907 = vdwg.mxu0
    %1908 = vst.msk [vmem:[#allocation11] sm:$0xff] %vm89, %v1900
    %1909 = vst.msk [vmem:[#allocation11 + $0x8] sm:$0xff] %vm89, %v1905
    // Predicated region
    $region42: #{deepseek_v2_attention.1} parent=1 // pred_check
      _
    $region43: #{deepseek_v2_attention.1} parent=1 // pred_check_branch
      %1911 = sbr.rel (0) target = $region45
    $region44: #{deepseek_v2_attention.1} parent=1 // pred_region
      %s1913 = ssub.s32 256, 256
      %1914 = vsyncadd [#allocation5], %s1913
      %s1915 = sshll.u32 [#allocation11], 4
      %s1916 = int_to_ptr.vmem [resolvable:$true] %s1915
      %1921 = dma.vmem_to_hbm [thread:$0]  %s1916, 256, %s6, [#allocation5], 128, 128, 8
    $region45: #{deepseek_v2_attention.1} parent=1 // pred_fallthru
      _
    // Predicated region
    $region46: #{deepseek_v2_attention.1} parent=1 // pred_check
      _
    $region47: #{deepseek_v2_attention.1} parent=1 // pred_check_branch
      %1923 = sbr.rel (0) target = $region49
    $region48: #{deepseek_v2_attention.1} parent=1 // pred_region
      %1924 = dma.done [#allocation5], 256
    $region49: #{deepseek_v2_attention.1} parent=1 // pred_fallthru
      _
    %1925 = vsyncpa [#allocation4], 1
    %1926 = vsyncpa [#allocation7], 1
    %1927 = vsyncpa [#allocation10], 1
    %1928 = vsyncpa [#allocation5], 1

</llo_original>
